<compile_context>
chip_gen: v5e
topology: v5e:2x2
jax: 0.10.0
libtpu: 0.0.40
codegen_flags: <defaults>
</compile_context>

<pallas_src>
import jax
import jax.numpy as jnp
from jax.experimental import pallas as pl
from jax.experimental.pallas import tpu as pltpu


def _round_up(x, m):
    return (x + m - 1) // m * m


def conv2d_relu(x, weight, gamma, beta, run_mean, run_var, *,
                stride=1, padding=1, eps=1e-5,
                compute_dtype=jnp.bfloat16, store_dtype=jnp.bfloat16,
                target_rows=1024, fold_taps=None, out_layout="NCHW"):
    """Fused Conv2d(no bias) -> BatchNorm2d(eval) -> ReLU.

    x: (N, C, H, W) float32 (PyTorch NCHW); weight: (Cout, Cin, KH, KW) OIHW.
    Returns NCHW (same dtype as x) by default; "NHWC" skips the final transpose.
    """
    N, C, H, W = x.shape
    Cout, Cin, KH, KW = weight.shape
    assert Cin == C
    assert stride == 1, "TODO(synk): stride > 1 not supported by the fused path"

    OH = (H + 2 * padding - KH) // stride + 1
    OW = (W + 2 * padding - KW) // stride + 1

    Cp = _round_up(Cout, 128)        # lane-dense output channels (Cout > 128 OK)
    OWp = _round_up(OW, 8)           # sublane-aligned row width -> free reshape
    Wp = OWp + KW - 1                # padded input width touched by the kernel
    Kf = KH * KW * C                 # folded contraction depth

    # Fold taps into the contraction when a single tap underfills the MXU depth.
    fold = (C < 128) if fold_taps is None else bool(fold_taps)

    cd = jnp.dtype(compute_dtype).itemsize
    sd = jnp.dtype(store_dtype).itemsize

    # ---- VMEM budget from hardware info (v5e/v6e: ~120 MiB, v7x: ~56 MiB) ----
    try:
        vmem_cap = int(pltpu.get_tpu_info().vmem_capacity_bytes)
    except Exception:
        vmem_cap = 64 * 2 ** 20      # conservative fallback (v7x per-core size)
    vmem_budget = vmem_cap - 8 * 2 ** 20

    def vmem_needed(th_):
        in_b = (th_ + KH - 1) * Wp * C * cd            # halo input block
        w_b = Kf * Cp * cd                             # weights (grid-invariant)
        out_b = th_ * OWp * Cp * sd                    # output block
        acc_b = th_ * OWp * Cp * 4                     # f32 accumulator / dot result
        patch_b = th_ * OWp * Kf * 4 if fold else 0    # folded patch transient
        vecs = 2 * Cp * 4                              # scale + bias
        return 2 * (in_b + w_b + out_b + vecs) + acc_b + patch_b + (2 << 20)

    # Row-tile height: ~target_rows output pixels per MXU call, shrunk only if
    # the blocks would not fit the VMEM budget (never clamp the limit instead).
    th = max(1, min(OH, target_rows // max(OWp, 1)))
    while th > 1 and vmem_needed(th) > vmem_budget:
        th = max(1, th // 2)
    # Prefer an exact divisor of OH near the target (no padded garbage rows).
    div = max(d for d in range(1, th + 1) if OH % d == 0)
    if 2 * div >= th:
        th = div
    OHp = OH if OH % th == 0 else _round_up(OH, th)
    n_row_tiles = OHp // th
    halo = th + KH - 1
    Hp = OHp + KH - 1

    vmem_limit = int(min(max(vmem_needed(th), 32 * 2 ** 20), vmem_budget))

    # ---- glue (plain JAX): NHWC bf16 pad + per-row-tile halo windows ----
    xn = jnp.transpose(x, (0, 2, 3, 1)).astype(compute_dtype)          # (N,H,W,C)
    xp = jnp.pad(xn, ((0, 0),
                      (padding, Hp - H - padding),
                      (padding, Wp - W - padding),
                      (0, 0)))                                         # (N,Hp,Wp,C)
    # Overlapping row windows, one per row tile: (N, n_row_tiles, halo, Wp, C).
    x_tiles = jnp.stack([xp[:, i * th:i * th + halo] for i in range(n_row_tiles)],
                        axis=1)

    # Weights: OIHW -> (kh, kw, cin) ordering, padded to Cp lanes, bf16.
    w_hwio = jnp.transpose(weight, (2, 3, 1, 0))                       # (KH,KW,C,Cout)
    if fold:
        wt = jnp.pad(w_hwio.reshape(Kf, Cout), ((0, 0), (0, Cp - Cout)))
    else:
        wt = jnp.pad(w_hwio.reshape(KH * KW, C, Cout),
                     ((0, 0), (0, 0), (0, Cp - Cout)))
    wt = wt.astype(compute_dtype)

    # Fold BatchNorm (eval) into per-output-channel scale/bias, kept in f32.
    scale = gamma / jnp.sqrt(run_var + eps)
    bias = beta - run_mean * scale
    scale_p = jnp.pad(scale, (0, Cp - Cout)).reshape(1, Cp).astype(jnp.float32)
    bias_p = jnp.pad(bias, (0, Cp - Cout)).reshape(1, Cp).astype(jnp.float32)

    # ---- kernels ----
    def kernel_folded(x_ref, w_ref, s_ref, b_ref, o_ref):
        # x_ref: (1,1,halo,Wp,C) bf16   w_ref: (Kf, Cp) bf16
        # s_ref/b_ref: (1, Cp) f32      o_ref: (1, th, OWp, Cp) bf16
        taps = []
        for kh in range(KH):
            for kw in range(KW):
                # Static slices on the ref (no per-tap temporaries); the concat
                # is done in f32 (the most general relayout path) and cast back
                # to bf16 for the MXU.
                taps.append(x_ref[0, 0, kh:kh + th, kw:kw + OWp, :]
                            .astype(jnp.float32))
        patch = jnp.concatenate(taps, axis=-1).astype(compute_dtype)
        patch = patch.reshape(th * OWp, Kf)
        acc = jnp.dot(patch, w_ref[...], preferred_element_type=jnp.float32)
        y = jnp.maximum(acc * s_ref[...] + b_ref[...], 0.0)
        o_ref[...] = y.reshape(1, th, OWp, Cp).astype(o_ref.dtype)

    def kernel_taps(x_ref, w_ref, s_ref, b_ref, o_ref, acc_ref):
        # x_ref: (1,1,halo,Wp,C) bf16   w_ref: (KH*KW, C, Cp) bf16
        # acc_ref: (th*OWp, Cp) f32 VMEM scratch (bounded live range).
        for kh in range(KH):
            for kw in range(KW):
                slab = x_ref[0, 0, kh:kh + th, kw:kw + OWp, :]
                slab = slab.reshape(th * OWp, C)
                contrib = jnp.dot(slab, w_ref[kh * KW + kw],
                                  preferred_element_type=jnp.float32)
                if kh == 0 and kw == 0:
                    acc_ref[...] = contrib
                else:
                    acc_ref[...] += contrib
        y = jnp.maximum(acc_ref[...] * s_ref[...] + b_ref[...], 0.0)
        o_ref[...] = y.reshape(1, th, OWp, Cp).astype(o_ref.dtype)

    if fold:
        kernel = kernel_folded
        w_spec = pl.BlockSpec((Kf, Cp), lambda n, i: (0, 0))
        scratch = []
    else:
        kernel = kernel_taps
        w_spec = pl.BlockSpec((KH * KW, C, Cp), lambda n, i: (0, 0, 0))
        scratch = [pltpu.VMEM((th * OWp, Cp), jnp.float32)]

    out = pl.pallas_call(
        kernel,
        out_shape=jax.ShapeDtypeStruct((N, OHp, OWp, Cp), store_dtype),
        grid_spec=pltpu.PrefetchScalarGridSpec(
            num_scalar_prefetch=0,
            # Batch axis first: on v7x the two TensorCores prefer splitting on N
            # (only the KH-1 halo rows are duplicated if they split on rows).
            grid=(N, n_row_tiles),
            in_specs=[
                pl.BlockSpec((1, 1, halo, Wp, C), lambda n, i: (n, i, 0, 0, 0)),
                w_spec,
                pl.BlockSpec((1, Cp), lambda n, i: (0, 0)),
                pl.BlockSpec((1, Cp), lambda n, i: (0, 0)),
            ],
            out_specs=pl.BlockSpec((1, th, OWp, Cp), lambda n, i: (n, i, 0, 0)),
            scratch_shapes=scratch,
        ),
        compiler_params=pltpu.CompilerParams(
            dimension_semantics=("parallel", "parallel"),
            vmem_limit_bytes=vmem_limit),
    )(x_tiles, wt, scale_p, bias_p)

    y = out[:, :OH, :OW, :Cout].astype(x.dtype)       # drop row/channel padding
    if out_layout == "NHWC":
        return y
    return jnp.transpose(y, (0, 3, 1, 2))             # PyTorch NCHW


if __name__ == "__main__":
    key = jax.random.PRNGKey(0)
    kx, kw_, kg, kb, km, kv = jax.random.split(key, 6)

    # Shapes implied by Conv2dReLU(4, 8, 3, padding=1) on a (2, 4, 16, 16) input.
    N, Cin, H, W = 2, 4, 16, 16
    Cout, KH, KW = 8, 3, 3
    stride, padding, eps = 1, 1, 1e-5

    x = jax.random.normal(kx, (N, Cin, H, W), dtype=jnp.float32)
    weight = jax.random.normal(kw_, (Cout, Cin, KH, KW), dtype=jnp.float32) * 0.1
    gamma = 1.0 + 0.1 * jax.random.normal(kg, (Cout,), dtype=jnp.float32)
    beta = 0.1 * jax.random.normal(kb, (Cout,), dtype=jnp.float32)
    run_mean = 0.1 * jax.random.normal(km, (Cout,), dtype=jnp.float32)
    run_var = jnp.abs(jax.random.normal(kv, (Cout,), dtype=jnp.float32)) + 0.5

    # Folded-tap path (auto for Cin=4) and the per-tap scratch-accumulator path.
    y_fold = conv2d_relu(x, weight, gamma, beta, run_mean, run_var,
                         stride=stride, padding=padding, eps=eps)
    y_taps = conv2d_relu(x, weight, gamma, beta, run_mean, run_var,
                         stride=stride, padding=padding, eps=eps,
                         fold_taps=False)
    y_fold, y_taps = jax.block_until_ready((y_fold, y_taps))

    # Pure-JAX reference on the same bf16-rounded operands (bf16 products are
    # exact in f32; output is stored in bf16, hence the ~1% tolerance).
    OH = (H + 2 * padding - KH) // stride + 1
    OW = (W + 2 * padding - KW) // stride + 1
    xr = x.astype(jnp.bfloat16).astype(jnp.float32)
    wr = weight.astype(jnp.bfloat16).astype(jnp.float32)
    conv_ref = jax.lax.conv_general_dilated(
        xr, wr, (stride, stride), [(padding, padding)] * 2,
        dimension_numbers=("NCHW", "OIHW", "NCHW"),
        precision=jax.lax.Precision.HIGHEST)
    scale = gamma / jnp.sqrt(run_var + eps)
    bias = beta - run_mean * scale
    ref = jnp.maximum(conv_ref * scale[None, :, None, None]
                      + bias[None, :, None, None], 0.0)

    assert y_fold.shape == (N, Cout, OH, OW), y_fold.shape
    assert y_taps.shape == (N, Cout, OH, OW), y_taps.shape
    err_fold = float(jnp.max(jnp.abs(y_fold - ref)))
    err_taps = float(jnp.max(jnp.abs(y_taps - ref)))
    assert jnp.allclose(y_fold, ref, rtol=2e-2, atol=2e-2), err_fold
    assert jnp.allclose(y_taps, ref, rtol=2e-2, atol=2e-2), err_taps
    assert jnp.allclose(y_fold, y_taps, rtol=2e-2, atol=2e-2)
    print("KERNEL_OK")
</pallas_src>

<mosaic_0001>
module attributes {stable_mosaic.version = 11 : i64} {
  func.func @kernel_folded(%arg0: i32, %arg1: i32, %arg2: memref<1x1x18x18x4xbf16, #tpu.memory_space<vmem>>, %arg3: memref<36x128xbf16, #tpu.memory_space<vmem>>, %arg4: memref<1x128xf32, #tpu.memory_space<vmem>>, %arg5: memref<1x128xf32, #tpu.memory_space<vmem>>, %arg6: memref<1x16x16x128xbf16, #tpu.memory_space<vmem>>) attributes {dimension_semantics = [#tpu.dimension_semantics<parallel>, #tpu.dimension_semantics<parallel>], iteration_bounds = array<i64: 2, 1>, scalar_prefetch = 0 : i64, scratch_operands = 0 : i64, tpu.core_type = #tpu.core_type<tc>, window_params = [{transform_indices = @transform_0, window_bounds = array<i64: 1, 1, 18, 18, 4>}, {pipeline_mode = #tpu.pipeline_mode<synchronous>, transform_indices = @transform_1, window_bounds = array<i64: 36, 128>}, {pipeline_mode = #tpu.pipeline_mode<synchronous>, transform_indices = @transform_2, window_bounds = array<i64: 1, 128>}, {pipeline_mode = #tpu.pipeline_mode<synchronous>, transform_indices = @transform_3, window_bounds = array<i64: 1, 128>}, {transform_indices = @transform_4, window_bounds = array<i64: 1, 16, 16, 128>}]} {
    %c0 = arith.constant 0 : index
    %c0_0 = arith.constant 0 : index
    %c0_1 = arith.constant 0 : index
    %c0_2 = arith.constant 0 : index
    %c0_3 = arith.constant 0 : index
    %0 = vector.load %arg2[%c0, %c0_0, %c0_1, %c0_2, %c0_3] : memref<1x1x18x18x4xbf16, #tpu.memory_space<vmem>>, vector<1x1x16x16x4xbf16>
    %1 = vector.shape_cast %0 : vector<1x1x16x16x4xbf16> to vector<16x16x4xbf16>
    %2 = arith.extf %1 : vector<16x16x4xbf16> to vector<16x16x4xf32>
    %c0_4 = arith.constant 0 : index
    %c0_5 = arith.constant 0 : index
    %c0_6 = arith.constant 0 : index
    %c1 = arith.constant 1 : index
    %c0_7 = arith.constant 0 : index
    %3 = vector.load %arg2[%c0_4, %c0_5, %c0_6, %c1, %c0_7] : memref<1x1x18x18x4xbf16, #tpu.memory_space<vmem>>, vector<1x1x16x16x4xbf16>
    %4 = vector.shape_cast %3 : vector<1x1x16x16x4xbf16> to vector<16x16x4xbf16>
    %5 = arith.extf %4 : vector<16x16x4xbf16> to vector<16x16x4xf32>
    %c0_8 = arith.constant 0 : index
    %c0_9 = arith.constant 0 : index
    %c0_10 = arith.constant 0 : index
    %c2 = arith.constant 2 : index
    %c0_11 = arith.constant 0 : index
    %6 = vector.load %arg2[%c0_8, %c0_9, %c0_10, %c2, %c0_11] : memref<1x1x18x18x4xbf16, #tpu.memory_space<vmem>>, vector<1x1x16x16x4xbf16>
    %7 = vector.shape_cast %6 : vector<1x1x16x16x4xbf16> to vector<16x16x4xbf16>
    %8 = arith.extf %7 : vector<16x16x4xbf16> to vector<16x16x4xf32>
    %c0_12 = arith.constant 0 : index
    %c0_13 = arith.constant 0 : index
    %c1_14 = arith.constant 1 : index
    %c0_15 = arith.constant 0 : index
    %c0_16 = arith.constant 0 : index
    %9 = vector.load %arg2[%c0_12, %c0_13, %c1_14, %c0_15, %c0_16] : memref<1x1x18x18x4xbf16, #tpu.memory_space<vmem>>, vector<1x1x16x16x4xbf16>
    %10 = vector.shape_cast %9 : vector<1x1x16x16x4xbf16> to vector<16x16x4xbf16>
    %11 = arith.extf %10 : vector<16x16x4xbf16> to vector<16x16x4xf32>
    %c0_17 = arith.constant 0 : index
    %c0_18 = arith.constant 0 : index
    %c1_19 = arith.constant 1 : index
    %c1_20 = arith.constant 1 : index
    %c0_21 = arith.constant 0 : index
    %12 = vector.load %arg2[%c0_17, %c0_18, %c1_19, %c1_20, %c0_21] : memref<1x1x18x18x4xbf16, #tpu.memory_space<vmem>>, vector<1x1x16x16x4xbf16>
    %13 = vector.shape_cast %12 : vector<1x1x16x16x4xbf16> to vector<16x16x4xbf16>
    %14 = arith.extf %13 : vector<16x16x4xbf16> to vector<16x16x4xf32>
    %c0_22 = arith.constant 0 : index
    %c0_23 = arith.constant 0 : index
    %c1_24 = arith.constant 1 : index
    %c2_25 = arith.constant 2 : index
    %c0_26 = arith.constant 0 : index
    %15 = vector.load %arg2[%c0_22, %c0_23, %c1_24, %c2_25, %c0_26] : memref<1x1x18x18x4xbf16, #tpu.memory_space<vmem>>, vector<1x1x16x16x4xbf16>
    %16 = vector.shape_cast %15 : vector<1x1x16x16x4xbf16> to vector<16x16x4xbf16>
    %17 = arith.extf %16 : vector<16x16x4xbf16> to vector<16x16x4xf32>
    %c0_27 = arith.constant 0 : index
    %c0_28 = arith.constant 0 : index
    %c2_29 = arith.constant 2 : index
    %c0_30 = arith.constant 0 : index
    %c0_31 = arith.constant 0 : index
    %18 = vector.load %arg2[%c0_27, %c0_28, %c2_29, %c0_30, %c0_31] : memref<1x1x18x18x4xbf16, #tpu.memory_space<vmem>>, vector<1x1x16x16x4xbf16>
    %19 = vector.shape_cast %18 : vector<1x1x16x16x4xbf16> to vector<16x16x4xbf16>
    %20 = arith.extf %19 : vector<16x16x4xbf16> to vector<16x16x4xf32>
    %c0_32 = arith.constant 0 : index
    %c0_33 = arith.constant 0 : index
    %c2_34 = arith.constant 2 : index
    %c1_35 = arith.constant 1 : index
    %c0_36 = arith.constant 0 : index
    %21 = vector.load %arg2[%c0_32, %c0_33, %c2_34, %c1_35, %c0_36] : memref<1x1x18x18x4xbf16, #tpu.memory_space<vmem>>, vector<1x1x16x16x4xbf16>
    %22 = vector.shape_cast %21 : vector<1x1x16x16x4xbf16> to vector<16x16x4xbf16>
    %23 = arith.extf %22 : vector<16x16x4xbf16> to vector<16x16x4xf32>
    %c0_37 = arith.constant 0 : index
    %c0_38 = arith.constant 0 : index
    %c2_39 = arith.constant 2 : index
    %c2_40 = arith.constant 2 : index
    %c0_41 = arith.constant 0 : index
    %24 = vector.load %arg2[%c0_37, %c0_38, %c2_39, %c2_40, %c0_41] : memref<1x1x18x18x4xbf16, #tpu.memory_space<vmem>>, vector<1x1x16x16x4xbf16>
    %25 = vector.shape_cast %24 : vector<1x1x16x16x4xbf16> to vector<16x16x4xbf16>
    %26 = arith.extf %25 : vector<16x16x4xbf16> to vector<16x16x4xf32>
    %27 = tpu.concatenate %2, %5, %8, %11, %14, %17, %20, %23, %26 in 2 : vector<16x16x4xf32>, vector<16x16x4xf32>, vector<16x16x4xf32>, vector<16x16x4xf32>, vector<16x16x4xf32>, vector<16x16x4xf32>, vector<16x16x4xf32>, vector<16x16x4xf32>, vector<16x16x4xf32> -> vector<16x16x36xf32>
    %28 = arith.truncf %27 : vector<16x16x36xf32> to vector<16x16x36xbf16>
    %29 = vector.shape_cast %28 : vector<16x16x36xbf16> to vector<256x36xbf16>
    %c0_42 = arith.constant 0 : index
    %c0_43 = arith.constant 0 : index
    %30 = vector.load %arg3[%c0_42, %c0_43] : memref<36x128xbf16, #tpu.memory_space<vmem>>, vector<36x128xbf16>
    %cst = arith.constant dense<0.000000e+00> : vector<256x128xf32>
    %31 = tpu.matmul %29, %30, %cst {dimension_numbers = #tpu.dot_dimension_numbers<[1], [0], [0], [1], [0, 0, 1, 1], [], []>} : vector<256x36xbf16>, vector<36x128xbf16>, vector<256x128xf32> -> vector<256x128xf32>
    %c0_44 = arith.constant 0 : index
    %c0_45 = arith.constant 0 : index
    %32 = vector.load %arg4[%c0_44, %c0_45] : memref<1x128xf32, #tpu.memory_space<vmem>>, vector<1x128xf32>
    %33 = vector.broadcast %32 : vector<1x128xf32> to vector<256x128xf32>
    %34 = arith.mulf %31, %33 : vector<256x128xf32>
    %c0_46 = arith.constant 0 : index
    %c0_47 = arith.constant 0 : index
    %35 = vector.load %arg5[%c0_46, %c0_47] : memref<1x128xf32, #tpu.memory_space<vmem>>, vector<1x128xf32>
    %36 = vector.broadcast %35 : vector<1x128xf32> to vector<256x128xf32>
    %37 = arith.addf %34, %36 : vector<256x128xf32>
    %cst_48 = arith.constant 0.000000e+00 : f32
    %38 = vector.broadcast %cst_48 : f32 to vector<256x128xf32>
    %39 = arith.maximumf %37, %38 : vector<256x128xf32>
    %40 = vector.shape_cast %39 : vector<256x128xf32> to vector<1x16x16x128xf32>
    %41 = arith.truncf %40 : vector<1x16x16x128xf32> to vector<1x16x16x128xbf16>
    %c0_49 = arith.constant 0 : index
    %c0_50 = arith.constant 0 : index
    %c0_51 = arith.constant 0 : index
    %c0_52 = arith.constant 0 : index
    %42 = vector.load %arg6[%c0_49, %c0_50, %c0_51, %c0_52] : memref<1x16x16x128xbf16, #tpu.memory_space<vmem>>, vector<1x16x16x128xbf16>
    tpu.vector_store %arg6[%c0_49, %c0_50, %c0_51, %c0_52], %41 {strides = array<i32>} : memref<1x16x16x128xbf16, #tpu.memory_space<vmem>>, vector<1x16x16x128xbf16>,
    return
  }
  func.func @transform_0(%arg0: i32, %arg1: i32) -> (i32, i32, i32, i32, i32) {
    %c0_i32 = arith.constant 0 : i32
    %c0_i32_0 = arith.constant 0 : i32
    %c0_i32_1 = arith.constant 0 : i32
    %c0_i32_2 = arith.constant 0 : i32
    return %arg0, %arg1, %c0_i32, %c0_i32_0, %c0_i32_1 : i32, i32, i32, i32, i32
  }
  func.func @transform_1(%arg0: i32, %arg1: i32) -> (i32, i32) {
    %c0_i32 = arith.constant 0 : i32
    %c0_i32_0 = arith.constant 0 : i32
    %c0_i32_1 = arith.constant 0 : i32
    return %c0_i32, %c0_i32_0 : i32, i32
  }
  func.func @transform_2(%arg0: i32, %arg1: i32) -> (i32, i32) {
    %c0_i32 = arith.constant 0 : i32
    %c0_i32_0 = arith.constant 0 : i32
    %c0_i32_1 = arith.constant 0 : i32
    return %c0_i32, %c0_i32_0 : i32, i32
  }
  func.func @transform_3(%arg0: i32, %arg1: i32) -> (i32, i32) {
    %c0_i32 = arith.constant 0 : i32
    %c0_i32_0 = arith.constant 0 : i32
    %c0_i32_1 = arith.constant 0 : i32
    return %c0_i32, %c0_i32_0 : i32, i32
  }
  func.func @transform_4(%arg0: i32, %arg1: i32) -> (i32, i32, i32, i32) {
    %c0_i32 = arith.constant 0 : i32
    %c0_i32_0 = arith.constant 0 : i32
    %c0_i32_1 = arith.constant 0 : i32
    return %arg0, %arg1, %c0_i32, %c0_i32_0 : i32, i32, i32, i32
  }
}

</mosaic_0001>

<llo_original>
// kernel: tpu_custom_call.1
$region0: #{tpu_custom_call.1}
  #allocation0 [shape = 'u32[]', space=smem, size = 0x4, offset = 0x4, fixed_abs, tag = 'smem constant byte address 0x4 - core index']
  #allocation1 [shape = 'u32[72,128]{1,0:T(1,128)}', space=vmem, size = 0x9000, scoped, tag = 'internal scratch']
  %s0 = inlined_call_operand.vmem [shape: bf16[2,1,18,18,4], index: 0, kind: input, shape index: {}]
  %s1 = inlined_call_operand.vmem [shape: bf16[36,128], index: 1, kind: input, shape index: {}]
  %s2 = inlined_call_operand.vmem [shape: f32[1,128], index: 2, kind: input, shape index: {}]
  %s3 = inlined_call_operand.vmem [shape: f32[1,128], index: 3, kind: input, shape index: {}]
  %s4 = inlined_call_operand.hbm [shape: bf16[2,16,16,128], index: 4, kind: output, shape index: {}]
  %s5 = sld [smem:[#allocation0]]
  $region49: #{tpu_custom_call.1} parent=0
    _
  %s7 = ssub.s32 1, %s5
  %s8 = scalar_select 0, %s7, %s5
  $region1: #{tpu_custom_call.1} parent=0
    #allocation2 [shape = 'u8[131072]{0}', space=vmem, size = 0x20000, scoped, tag = 'output window, operand 0']
    #allocation3 [shape = 's32[2]{0}', space=sflag, size = 0x8, scoped, tag = 'scoped memory for tpu_custom_call.1']
    %9 = vsyncpa [#allocation3], 0
    %s10 = scalar_lea.sflag [#allocation3], 1
    %11 = vsyncpa %s10, 0
    loop: start=0, step=1, limit=4
    $region2: #{tpu_custom_call.1} parent=1 // loop_pre_header
      _
    $region3: #{tpu_custom_call.1} parent=1 // loop_header
      %s13 = sphi 0, %s17
      %p14 = scmp.ge.s32.totalorder %s13, 4
      %s20 = sphi 0, %s32
      %s21 = sphi 0, %s28
      %s22 = sphi 0, %s20
      %s23 = sphi 0, %s21
      %s24 = sphi 0, %s22
      %s25 = sphi 0, %s23
      %s37 = sphi 0, %s39
      %s40 = sphi 0, %s37
      %s41 = sphi 0, %s40
      %s57 = sphi 0, %s41
      %s61 = sphi 0, %s61
      %s63 = sphi 0, %s61
      %s64 = sphi 0, %s63
      %s78 = sphi 0, %s64
      %s82 = sphi 0, %s82
      %s84 = sphi 0, %s82
      %s85 = sphi 0, %s84
      %s99 = sphi 0, %s85
      %s103 = sphi 0, %s103
      %s105 = sphi 0, %s103
      %s106 = sphi 0, %s105
      %s120 = sphi 0, %s106
      %s128 = sphi 0, %s130
      %s131 = sphi 0, %s128
      %s132 = sphi 0, %s131
      %s148 = sphi 0, %s132
    $region4: #{tpu_custom_call.1} parent=1 // loop_header_branch
      %16 = sbr.rel (%p14) target = $region8
    $region5: #{tpu_custom_call.1} parent=1 // loop_body
      %s18 = ssub.s32 %s13, 1
      %s19 = ssub.s32 %s13, 2
      %s26 = sadd.s32 1, %s21
      %p27 = scmp.ge.s32.totalorder %s26, 1
      %s28 = scalar_select %p27, 0, %s26
      %s29 = sadd.s32 1, %s20
      %s30 = scalar_select %p27, %s29, %s20
      %p31 = scmp.ge.s32.totalorder %s30, 2
      %s32 = scalar_select %p31, 0, %s30
      %s33 = ssub.s32 %s20, %s32
      %s34 = ssub.s32 %s21, %s28
      %s35 = sor.u32 %s33, %s34
      %p36 = scmp.eq.s32.totalorder %s35, 0
      %s38 = sadd.s32 %s37, 1
      %s39 = scalar_select %p36, %s37, %s38
      %p42 = pneg %p36
      %p43 = scmp.eq.s32.totalorder %s13, 1
      %p44 = por %p42, %p43
      %p45 = scmp.ne.s32.totalorder %s37, %s40
      %p46 = scmp.eq.s32.totalorder %s13, 0
      %p47 = por %p45, %p46
      %p48 = scmp.ne.s32.totalorder %s37, %s40
      %p49 = scmp.eq.s32.totalorder %s18, 1
      %p50 = por %p48, %p49
      %p51 = scmp.ne.s32.totalorder %s40, %s41
      %p52 = scmp.eq.s32.totalorder %s18, 0
      %p53 = por %p51, %p52
      %p54 = scmp.ne.s32.totalorder %s40, %s41
      %p55 = scmp.eq.s32.totalorder %s19, 1
      %p56 = por %p54, %p55
      %p58 = scmp.ne.s32.totalorder %s41, %s57
      %p59 = scmp.eq.s32.totalorder %s19, 0
      %p60 = por %p58, %p59
      %s62 = sadd.s32 %s61, 1
      %p65 = scmp.eq.s32.totalorder %s13, 1
      %p66 = scmp.ne.s32.totalorder %s61, %s63
      %p67 = scmp.eq.s32.totalorder %s13, 0
      %p68 = por %p66, %p67
      %p69 = scmp.ne.s32.totalorder %s61, %s63
      %p70 = scmp.eq.s32.totalorder %s18, 1
      %p71 = por %p69, %p70
      %p72 = scmp.ne.s32.totalorder %s63, %s64
      %p73 = scmp.eq.s32.totalorder %s18, 0
      %p74 = por %p72, %p73
      %p75 = scmp.ne.s32.totalorder %s63, %s64
      %p76 = scmp.eq.s32.totalorder %s19, 1
      %p77 = por %p75, %p76
      %p79 = scmp.ne.s32.totalorder %s64, %s78
      %p80 = scmp.eq.s32.totalorder %s19, 0
      %p81 = por %p79, %p80
      %s83 = sadd.s32 %s82, 1
      %p86 = scmp.eq.s32.totalorder %s13, 1
      %p87 = scmp.ne.s32.totalorder %s82, %s84
      %p88 = scmp.eq.s32.totalorder %s13, 0
      %p89 = por %p87, %p88
      %p90 = scmp.ne.s32.totalorder %s82, %s84
      %p91 = scmp.eq.s32.totalorder %s18, 1
      %p92 = por %p90, %p91
      %p93 = scmp.ne.s32.totalorder %s84, %s85
      %p94 = scmp.eq.s32.totalorder %s18, 0
      %p95 = por %p93, %p94
      %p96 = scmp.ne.s32.totalorder %s84, %s85
      %p97 = scmp.eq.s32.totalorder %s19, 1
      %p98 = por %p96, %p97
      %p100 = scmp.ne.s32.totalorder %s85, %s99
      %p101 = scmp.eq.s32.totalorder %s19, 0
      %p102 = por %p100, %p101
      %s104 = sadd.s32 %s103, 1
      %p107 = scmp.eq.s32.totalorder %s13, 1
      %p108 = scmp.ne.s32.totalorder %s103, %s105
      %p109 = scmp.eq.s32.totalorder %s13, 0
      %p110 = por %p108, %p109
      %p111 = scmp.ne.s32.totalorder %s103, %s105
      %p112 = scmp.eq.s32.totalorder %s18, 1
      %p113 = por %p111, %p112
      %p114 = scmp.ne.s32.totalorder %s105, %s106
      %p115 = scmp.eq.s32.totalorder %s18, 0
      %p116 = por %p114, %p115
      %p117 = scmp.ne.s32.totalorder %s105, %s106
      %p118 = scmp.eq.s32.totalorder %s19, 1
      %p119 = por %p117, %p118
      %p121 = scmp.ne.s32.totalorder %s106, %s120
      %p122 = scmp.eq.s32.totalorder %s19, 0
      %p123 = por %p121, %p122
      %s124 = ssub.s32 %s20, %s32
      %s125 = ssub.s32 %s21, %s28
      %s126 = sor.u32 %s124, %s125
      %p127 = scmp.eq.s32.totalorder %s126, 0
      %s129 = sadd.s32 %s128, 1
      %s130 = scalar_select %p127, %s128, %s129
      %p133 = pneg %p127
      %p134 = scmp.eq.s32.totalorder %s13, 1
      %p135 = por %p133, %p134
      %p136 = scmp.ne.s32.totalorder %s128, %s131
      %p137 = scmp.eq.s32.totalorder %s13, 0
      %p138 = por %p136, %p137
      %p139 = scmp.ne.s32.totalorder %s128, %s131
      %p140 = scmp.eq.s32.totalorder %s18, 1
      %p141 = por %p139, %p140
      %p142 = scmp.ne.s32.totalorder %s131, %s132
      %p143 = scmp.eq.s32.totalorder %s18, 0
      %p144 = por %p142, %p143
      %p145 = scmp.ne.s32.totalorder %s131, %s132
      %p146 = scmp.eq.s32.totalorder %s19, 1
      %p147 = por %p145, %p146
      %p149 = scmp.ne.s32.totalorder %s132, %s148
      %p150 = scmp.eq.s32.totalorder %s19, 0
      %p151 = por %p149, %p150
      %p152 = scmp.le.s32.totalorder 1, %s13
      %p153 = scmp.lt.s32.totalorder %s13, 3
      %p154 = pnand %p152, %p153
      %p155 = pneg %p154
      // Predicated region
      $region9: #{tpu_custom_call.1} parent=5 // pred_check
        _
      $region10: #{tpu_custom_call.1} parent=5 // pred_check_branch
        %157 = sbr.rel (%p154) target = $region12
      $region11: #{tpu_custom_call.1} parent=5 // pred_region
        %s158 = ssub.s32 %s13, 1
        // Predicated region
        $region13: #{tpu_custom_call.1} parent=11 // pred_check
          %p159 = pneg %p74
        $region14: #{tpu_custom_call.1} parent=11 // pred_check_branch
          %161 = sbr.rel (%p159) target = $region16
        $region15: #{tpu_custom_call.1} parent=11 // pred_region
          _
        $region16: #{tpu_custom_call.1} parent=11 // pred_fallthru
          _
        // Predicated region
        $region17: #{tpu_custom_call.1} parent=11 // pred_check
          %p162 = pneg %p95
        $region18: #{tpu_custom_call.1} parent=11 // pred_check_branch
          %164 = sbr.rel (%p162) target = $region20
        $region19: #{tpu_custom_call.1} parent=11 // pred_region
          _
        $region20: #{tpu_custom_call.1} parent=11 // pred_fallthru
          _
        // Predicated region
        $region21: #{tpu_custom_call.1} parent=11 // pred_check
          %p165 = pneg %p116
        $region22: #{tpu_custom_call.1} parent=11 // pred_check_branch
          %167 = sbr.rel (%p165) target = $region24
        $region23: #{tpu_custom_call.1} parent=11 // pred_region
          _
        $region24: #{tpu_custom_call.1} parent=11 // pred_fallthru
          _
      $region12: #{tpu_custom_call.1} parent=5 // pred_fallthru
        _
      %p168 = scmp.lt.s32.totalorder %s13, 2
      // Predicated region
      $region25: #{tpu_custom_call.1} parent=5 // pred_check
        %p169 = pneg %p168
      $region26: #{tpu_custom_call.1} parent=5 // pred_check_branch
        %171 = sbr.rel (%p169) target = $region28
      $region27: #{tpu_custom_call.1} parent=5 // pred_region
        // Predicated region
        $region29: #{tpu_custom_call.1} parent=27 // pred_check
          %p172 = pneg %p47
        $region30: #{tpu_custom_call.1} parent=27 // pred_check_branch
          %174 = sbr.rel (%p172) target = $region32
        $region31: #{tpu_custom_call.1} parent=27 // pred_region
          %p175 = scmp.lt.s32.totalorder %s20, 1
          %s176 = scalar_select %p175, %s20, 1
          %p177 = scmp.lt.s32.totalorder %s21, 0
          %s178 = scalar_select %p177, %s21, 0
          %s179 = smul.addr %s178, 54
          %s180 = smul.addr %s176, 54
          %s181 = sadd.s32 %s179, %s180
          %s182 = smul.addr %s181, 4
          %s183 = scalar_lea.vmem %s0, %s182
        $region32: #{tpu_custom_call.1} parent=27 // pred_fallthru
          _
      $region28: #{tpu_custom_call.1} parent=5 // pred_fallthru
        _
      %p184 = scmp.le.s32.totalorder 1, %s13
      %p185 = scmp.lt.s32.totalorder %s13, 3
      %p186 = pnand %p184, %p185
      %p187 = pneg %p186
      // Predicated region
      $region33: #{tpu_custom_call.1} parent=5 // pred_check
        _
      $region34: #{tpu_custom_call.1} parent=5 // pred_check_branch
        %189 = sbr.rel (%p186) target = $region36
      $region35: #{tpu_custom_call.1} parent=5 // pred_region
        %s190 = ssub.s32 %s13, 1
        %p191 = scmp.lt.s32.totalorder %s22, 1
        %s192 = scalar_select %p191, %s22, 1
        %p193 = scmp.lt.s32.totalorder %s23, 0
        %s194 = scalar_select %p193, %s23, 0
        %s195 = smul.addr %s194, 54
        %s196 = smul.addr %s192, 54
        %s197 = sadd.s32 %s195, %s196
        %s198 = smul.addr %s197, 4
        %s199 = scalar_lea.vmem %s0, %s198
        %p200 = pneg %p53
        %p201 = pneg %p50
        %p202 = pneg %p74
        %p203 = pneg %p71
        %p204 = pneg %p95
        %p205 = pneg %p92
        %p206 = pneg %p116
        %p207 = pneg %p113
        %p208 = pneg %p144
        %p209 = pneg %p141
        %s210 = sand.u32 %s131, 1
        %s211 = scalar_lea.sflag [#allocation3], %s210
        %s212 = sand.u32 %s131, 1
        %s213 = smul.addr %s212, 128
        %s214 = scalar_lea.vmem [#allocation2], %s213
        %p215 = scmp.lt.s32.totalorder %s22, 1
        %s216 = scalar_select %p215, %s22, 1
        %p217 = scmp.lt.s32.totalorder %s23, 0
        %s218 = scalar_select %p217, %s23, 0
        %s219 = smul.addr %s218, 54
        %s220 = smul.addr %s216, 54
        %s221 = sadd.s32 %s219, %s220
        %s222 = smul.addr %s221, 4
        %s223 = scalar_lea.vmem %s0, %s222
        %s224 = smul.u32 16, %s23
        %v226 = vld [vmem:[%s223] sm:$0xf]
        %v227 = vld [vmem:[%s223 + $0x4] sm:$0xf]
        %v228 = vld [vmem:[%s223 + $0xc] sm:$0xf]
        %v229 = vld [vmem:[%s223 + $0x10] sm:$0xf]
        %v230 = vld [vmem:[%s223 + $0x18] sm:$0xf]
        %v231 = vld [vmem:[%s223 + $0x1c] sm:$0xf]
        %v232 = vld [vmem:[%s223 + $0x24] sm:$0xf]
        %v233 = vld [vmem:[%s223 + $0x28] sm:$0xf]
        %v234 = vld [vmem:[%s223 + $0x30] sm:$0xf]
        %v235 = vld [vmem:[%s223 + $0x34] sm:$0xf]
        %v236 = vld [vmem:[%s223 + $0x3c] sm:$0xf]
        %v237 = vld [vmem:[%s223 + $0x40] sm:$0xf]
        %v238 = vld [vmem:[%s223 + $0x48] sm:$0xf]
        %v239 = vld [vmem:[%s223 + $0x4c] sm:$0xf]
        %v240 = vld [vmem:[%s223 + $0x54] sm:$0xf]
        %v241 = vld [vmem:[%s223 + $0x58] sm:$0xf]
        %v242 = vld [vmem:[%s223 + $0x60] sm:$0xf]
        %v243 = vld [vmem:[%s223 + $0x64] sm:$0xf]
        %v244 = vld [vmem:[%s223 + $0x6c] sm:$0xf]
        %v245 = vld [vmem:[%s223 + $0x70] sm:$0xf]
        %v246 = vld [vmem:[%s223 + $0x78] sm:$0xf]
        %v247 = vld [vmem:[%s223 + $0x7c] sm:$0xf]
        %v248 = vld [vmem:[%s223 + $0x84] sm:$0xf]
        %v249 = vld [vmem:[%s223 + $0x88] sm:$0xf]
        %v250 = vld [vmem:[%s223 + $0x90] sm:$0xf]
        %v251 = vld [vmem:[%s223 + $0x94] sm:$0xf]
        %v252 = vld [vmem:[%s223 + $0x9c] sm:$0xf]
        %v253 = vld [vmem:[%s223 + $0xa0] sm:$0xf]
        %v254 = vld [vmem:[%s223 + $0xa8] sm:$0xf]
        %v255 = vld [vmem:[%s223 + $0xac] sm:$0xf]
        %v256 = vld [vmem:[%s223 + $0xb4] sm:$0xf]
        %v257 = vld [vmem:[%s223 + $0xb8] sm:$0xf]
        %v258 = vunpack.c.l.bf16 %v226
        %v259 = vunpack.c.l.bf16 %v227
        %v260 = vunpack.c.l.bf16 %v228
        %v261 = vunpack.c.l.bf16 %v229
        %v262 = vunpack.c.l.bf16 %v230
        %v263 = vunpack.c.l.bf16 %v231
        %v264 = vunpack.c.l.bf16 %v232
        %v265 = vunpack.c.l.bf16 %v233
        %v266 = vunpack.c.l.bf16 %v234
        %v267 = vunpack.c.l.bf16 %v235
        %v268 = vunpack.c.l.bf16 %v236
        %v269 = vunpack.c.l.bf16 %v237
        %v270 = vunpack.c.l.bf16 %v238
        %v271 = vunpack.c.l.bf16 %v239
        %v272 = vunpack.c.l.bf16 %v240
        %v273 = vunpack.c.l.bf16 %v241
        %v274 = vunpack.c.l.bf16 %v242
        %v275 = vunpack.c.l.bf16 %v243
        %v276 = vunpack.c.l.bf16 %v244
        %v277 = vunpack.c.l.bf16 %v245
        %v278 = vunpack.c.l.bf16 %v246
        %v279 = vunpack.c.l.bf16 %v247
        %v280 = vunpack.c.l.bf16 %v248
        %v281 = vunpack.c.l.bf16 %v249
        %v282 = vunpack.c.l.bf16 %v250
        %v283 = vunpack.c.l.bf16 %v251
        %v284 = vunpack.c.l.bf16 %v252
        %v285 = vunpack.c.l.bf16 %v253
        %v286 = vunpack.c.l.bf16 %v254
        %v287 = vunpack.c.l.bf16 %v255
        %v288 = vunpack.c.l.bf16 %v256
        %v289 = vunpack.c.l.bf16 %v257
        %v290 = vld [vmem:[%s223 + $0x8] sm:$0x1]
        %v291 = vld [vmem:[%s223 + $0x14] sm:$0x1]
        %v292 = vld [vmem:[%s223 + $0x20] sm:$0x1]
        %v293 = vld [vmem:[%s223 + $0x2c] sm:$0x1]
        %v294 = vld [vmem:[%s223 + $0x38] sm:$0x1]
        %v295 = vld [vmem:[%s223 + $0x44] sm:$0x1]
        %v296 = vld [vmem:[%s223 + $0x50] sm:$0x1]
        %v297 = vld [vmem:[%s223 + $0x5c] sm:$0x1]
        %v298 = vld [vmem:[%s223 + $0x68] sm:$0x1]
        %v299 = vld [vmem:[%s223 + $0x74] sm:$0x1]
        %v300 = vld [vmem:[%s223 + $0x80] sm:$0x1]
        %v301 = vld [vmem:[%s223 + $0x8c] sm:$0x1]
        %v302 = vld [vmem:[%s223 + $0x98] sm:$0x1]
        %v303 = vld [vmem:[%s223 + $0xa4] sm:$0x1]
        %v304 = vld [vmem:[%s223 + $0xb0] sm:$0x1]
        %v305 = vld [vmem:[%s223 + $0xbc] sm:$0x1]
        %v306 = vunpack.c.l.bf16 %v290
        %v307 = vunpack.c.l.bf16 %v291
        %v308 = vunpack.c.l.bf16 %v292
        %v309 = vunpack.c.l.bf16 %v293
        %v310 = vunpack.c.l.bf16 %v294
        %v311 = vunpack.c.l.bf16 %v295
        %v312 = vunpack.c.l.bf16 %v296
        %v313 = vunpack.c.l.bf16 %v297
        %v314 = vunpack.c.l.bf16 %v298
        %v315 = vunpack.c.l.bf16 %v299
        %v316 = vunpack.c.l.bf16 %v300
        %v317 = vunpack.c.l.bf16 %v301
        %v318 = vunpack.c.l.bf16 %v302
        %v319 = vunpack.c.l.bf16 %v303
        %v320 = vunpack.c.l.bf16 %v304
        %v321 = vunpack.c.l.bf16 %v305
        %v322 = vld [vmem:[%s223] sm:$0xe]
        %v323 = vld [vmem:[%s223 + $0xc] sm:$0xe]
        %v324 = vld [vmem:[%s223 + $0x18] sm:$0xe]
        %v325 = vld [vmem:[%s223 + $0x24] sm:$0xe]
        %v326 = vld [vmem:[%s223 + $0x30] sm:$0xe]
        %v327 = vld [vmem:[%s223 + $0x3c] sm:$0xe]
        %v328 = vld [vmem:[%s223 + $0x48] sm:$0xe]
        %v329 = vld [vmem:[%s223 + $0x54] sm:$0xe]
        %v330 = vld [vmem:[%s223 + $0x60] sm:$0xe]
        %v331 = vld [vmem:[%s223 + $0x6c] sm:$0xe]
        %v332 = vld [vmem:[%s223 + $0x78] sm:$0xe]
        %v333 = vld [vmem:[%s223 + $0x84] sm:$0xe]
        %v334 = vld [vmem:[%s223 + $0x90] sm:$0xe]
        %v335 = vld [vmem:[%s223 + $0x9c] sm:$0xe]
        %v336 = vld [vmem:[%s223 + $0xa8] sm:$0xe]
        %v337 = vld [vmem:[%s223 + $0xb4] sm:$0xe]
        %v338 = vunpack.c.l.bf16 %v322
        %v339 = vunpack.c.l.bf16 %v323
        %v340 = vunpack.c.l.bf16 %v324
        %v341 = vunpack.c.l.bf16 %v325
        %v342 = vunpack.c.l.bf16 %v326
        %v343 = vunpack.c.l.bf16 %v327
        %v344 = vunpack.c.l.bf16 %v328
        %v345 = vunpack.c.l.bf16 %v329
        %v346 = vunpack.c.l.bf16 %v330
        %v347 = vunpack.c.l.bf16 %v331
        %v348 = vunpack.c.l.bf16 %v332
        %v349 = vunpack.c.l.bf16 %v333
        %v350 = vunpack.c.l.bf16 %v334
        %v351 = vunpack.c.l.bf16 %v335
        %v352 = vunpack.c.l.bf16 %v336
        %v353 = vunpack.c.l.bf16 %v337
        %s354 = scalar_lea.vmem %s223, 12
        %v355 = vld [vmem:[%s354] sm:$0xf]
        %v356 = vld [vmem:[%s354 + $0x4] sm:$0xf]
        %v357 = vld [vmem:[%s354 + $0xc] sm:$0xf]
        %v358 = vld [vmem:[%s354 + $0x10] sm:$0xf]
        %v359 = vld [vmem:[%s354 + $0x18] sm:$0xf]
        %v360 = vld [vmem:[%s354 + $0x1c] sm:$0xf]
        %v361 = vld [vmem:[%s354 + $0x24] sm:$0xf]
        %v362 = vld [vmem:[%s354 + $0x28] sm:$0xf]
        %v363 = vld [vmem:[%s354 + $0x30] sm:$0xf]
        %v364 = vld [vmem:[%s354 + $0x34] sm:$0xf]
        %v365 = vld [vmem:[%s354 + $0x3c] sm:$0xf]
        %v366 = vld [vmem:[%s354 + $0x40] sm:$0xf]
        %v367 = vld [vmem:[%s354 + $0x48] sm:$0xf]
        %v368 = vld [vmem:[%s354 + $0x4c] sm:$0xf]
        %v369 = vld [vmem:[%s354 + $0x54] sm:$0xf]
        %v370 = vld [vmem:[%s354 + $0x58] sm:$0xf]
        %v371 = vld [vmem:[%s354 + $0x60] sm:$0xf]
        %v372 = vld [vmem:[%s354 + $0x64] sm:$0xf]
        %v373 = vld [vmem:[%s354 + $0x6c] sm:$0xf]
        %v374 = vld [vmem:[%s354 + $0x70] sm:$0xf]
        %v375 = vld [vmem:[%s354 + $0x78] sm:$0xf]
        %v376 = vld [vmem:[%s354 + $0x7c] sm:$0xf]
        %v377 = vld [vmem:[%s354 + $0x84] sm:$0xf]
        %v378 = vld [vmem:[%s354 + $0x88] sm:$0xf]
        %v379 = vld [vmem:[%s354 + $0x90] sm:$0xf]
        %v380 = vld [vmem:[%s354 + $0x94] sm:$0xf]
        %v381 = vld [vmem:[%s354 + $0x9c] sm:$0xf]
        %v382 = vld [vmem:[%s354 + $0xa0] sm:$0xf]
        %v383 = vld [vmem:[%s354 + $0xa8] sm:$0xf]
        %v384 = vld [vmem:[%s354 + $0xac] sm:$0xf]
        %v385 = vld [vmem:[%s354 + $0xb4] sm:$0xf]
        %v386 = vld [vmem:[%s354 + $0xb8] sm:$0xf]
        %v387 = vunpack.c.l.bf16 %v355
        %v388 = vunpack.c.l.bf16 %v356
        %v389 = vunpack.c.l.bf16 %v357
        %v390 = vunpack.c.l.bf16 %v358
        %v391 = vunpack.c.l.bf16 %v359
        %v392 = vunpack.c.l.bf16 %v360
        %v393 = vunpack.c.l.bf16 %v361
        %v394 = vunpack.c.l.bf16 %v362
        %v395 = vunpack.c.l.bf16 %v363
        %v396 = vunpack.c.l.bf16 %v364
        %v397 = vunpack.c.l.bf16 %v365
        %v398 = vunpack.c.l.bf16 %v366
        %v399 = vunpack.c.l.bf16 %v367
        %v400 = vunpack.c.l.bf16 %v368
        %v401 = vunpack.c.l.bf16 %v369
        %v402 = vunpack.c.l.bf16 %v370
        %v403 = vunpack.c.l.bf16 %v371
        %v404 = vunpack.c.l.bf16 %v372
        %v405 = vunpack.c.l.bf16 %v373
        %v406 = vunpack.c.l.bf16 %v374
        %v407 = vunpack.c.l.bf16 %v375
        %v408 = vunpack.c.l.bf16 %v376
        %v409 = vunpack.c.l.bf16 %v377
        %v410 = vunpack.c.l.bf16 %v378
        %v411 = vunpack.c.l.bf16 %v379
        %v412 = vunpack.c.l.bf16 %v380
        %v413 = vunpack.c.l.bf16 %v381
        %v414 = vunpack.c.l.bf16 %v382
        %v415 = vunpack.c.l.bf16 %v383
        %v416 = vunpack.c.l.bf16 %v384
        %v417 = vunpack.c.l.bf16 %v385
        %v418 = vunpack.c.l.bf16 %v386
        %v419 = vld [vmem:[%s354 + $0x8] sm:$0x1]
        %v420 = vld [vmem:[%s354 + $0x14] sm:$0x1]
        %v421 = vld [vmem:[%s354 + $0x20] sm:$0x1]
        %v422 = vld [vmem:[%s354 + $0x2c] sm:$0x1]
        %v423 = vld [vmem:[%s354 + $0x38] sm:$0x1]
        %v424 = vld [vmem:[%s354 + $0x44] sm:$0x1]
        %v425 = vld [vmem:[%s354 + $0x50] sm:$0x1]
        %v426 = vld [vmem:[%s354 + $0x5c] sm:$0x1]
        %v427 = vld [vmem:[%s354 + $0x68] sm:$0x1]
        %v428 = vld [vmem:[%s354 + $0x74] sm:$0x1]
        %v429 = vld [vmem:[%s354 + $0x80] sm:$0x1]
        %v430 = vld [vmem:[%s354 + $0x8c] sm:$0x1]
        %v431 = vld [vmem:[%s354 + $0x98] sm:$0x1]
        %v432 = vld [vmem:[%s354 + $0xa4] sm:$0x1]
        %v433 = vld [vmem:[%s354 + $0xb0] sm:$0x1]
        %v434 = vld [vmem:[%s354 + $0xbc] sm:$0x1]
        %v435 = vunpack.c.l.bf16 %v419
        %v436 = vunpack.c.l.bf16 %v420
        %v437 = vunpack.c.l.bf16 %v421
        %v438 = vunpack.c.l.bf16 %v422
        %v439 = vunpack.c.l.bf16 %v423
        %v440 = vunpack.c.l.bf16 %v424
        %v441 = vunpack.c.l.bf16 %v425
        %v442 = vunpack.c.l.bf16 %v426
        %v443 = vunpack.c.l.bf16 %v427
        %v444 = vunpack.c.l.bf16 %v428
        %v445 = vunpack.c.l.bf16 %v429
        %v446 = vunpack.c.l.bf16 %v430
        %v447 = vunpack.c.l.bf16 %v431
        %v448 = vunpack.c.l.bf16 %v432
        %v449 = vunpack.c.l.bf16 %v433
        %v450 = vunpack.c.l.bf16 %v434
        %v451 = vld [vmem:[%s354] sm:$0xe]
        %v452 = vld [vmem:[%s354 + $0xc] sm:$0xe]
        %v453 = vld [vmem:[%s354 + $0x18] sm:$0xe]
        %v454 = vld [vmem:[%s354 + $0x24] sm:$0xe]
        %v455 = vld [vmem:[%s354 + $0x30] sm:$0xe]
        %v456 = vld [vmem:[%s354 + $0x3c] sm:$0xe]
        %v457 = vld [vmem:[%s354 + $0x48] sm:$0xe]
        %v458 = vld [vmem:[%s354 + $0x54] sm:$0xe]
        %v459 = vld [vmem:[%s354 + $0x60] sm:$0xe]
        %v460 = vld [vmem:[%s354 + $0x6c] sm:$0xe]
        %v461 = vld [vmem:[%s354 + $0x78] sm:$0xe]
        %v462 = vld [vmem:[%s354 + $0x84] sm:$0xe]
        %v463 = vld [vmem:[%s354 + $0x90] sm:$0xe]
        %v464 = vld [vmem:[%s354 + $0x9c] sm:$0xe]
        %v465 = vld [vmem:[%s354 + $0xa8] sm:$0xe]
        %v466 = vld [vmem:[%s354 + $0xb4] sm:$0xe]
        %v467 = vunpack.c.l.bf16 %v451
        %v468 = vunpack.c.l.bf16 %v452
        %v469 = vunpack.c.l.bf16 %v453
        %v470 = vunpack.c.l.bf16 %v454
        %v471 = vunpack.c.l.bf16 %v455
        %v472 = vunpack.c.l.bf16 %v456
        %v473 = vunpack.c.l.bf16 %v457
        %v474 = vunpack.c.l.bf16 %v458
        %v475 = vunpack.c.l.bf16 %v459
        %v476 = vunpack.c.l.bf16 %v460
        %v477 = vunpack.c.l.bf16 %v461
        %v478 = vunpack.c.l.bf16 %v462
        %v479 = vunpack.c.l.bf16 %v463
        %v480 = vunpack.c.l.bf16 %v464
        %v481 = vunpack.c.l.bf16 %v465
        %v482 = vunpack.c.l.bf16 %v466
        %s483 = scalar_lea.vmem %s223, 24
        %v484 = vld [vmem:[%s483] sm:$0xf]
        %v485 = vld [vmem:[%s483 + $0x4] sm:$0xf]
        %v486 = vld [vmem:[%s483 + $0xc] sm:$0xf]
        %v487 = vld [vmem:[%s483 + $0x10] sm:$0xf]
        %v488 = vld [vmem:[%s483 + $0x18] sm:$0xf]
        %v489 = vld [vmem:[%s483 + $0x1c] sm:$0xf]
        %v490 = vld [vmem:[%s483 + $0x24] sm:$0xf]
        %v491 = vld [vmem:[%s483 + $0x28] sm:$0xf]
        %v492 = vld [vmem:[%s483 + $0x30] sm:$0xf]
        %v493 = vld [vmem:[%s483 + $0x34] sm:$0xf]
        %v494 = vld [vmem:[%s483 + $0x3c] sm:$0xf]
        %v495 = vld [vmem:[%s483 + $0x40] sm:$0xf]
        %v496 = vld [vmem:[%s483 + $0x48] sm:$0xf]
        %v497 = vld [vmem:[%s483 + $0x4c] sm:$0xf]
        %v498 = vld [vmem:[%s483 + $0x54] sm:$0xf]
        %v499 = vld [vmem:[%s483 + $0x58] sm:$0xf]
        %v500 = vld [vmem:[%s483 + $0x60] sm:$0xf]
        %v501 = vld [vmem:[%s483 + $0x64] sm:$0xf]
        %v502 = vld [vmem:[%s483 + $0x6c] sm:$0xf]
        %v503 = vld [vmem:[%s483 + $0x70] sm:$0xf]
        %v504 = vld [vmem:[%s483 + $0x78] sm:$0xf]
        %v505 = vld [vmem:[%s483 + $0x7c] sm:$0xf]
        %v506 = vld [vmem:[%s483 + $0x84] sm:$0xf]
        %v507 = vld [vmem:[%s483 + $0x88] sm:$0xf]
        %v508 = vld [vmem:[%s483 + $0x90] sm:$0xf]
        %v509 = vld [vmem:[%s483 + $0x94] sm:$0xf]
        %v510 = vld [vmem:[%s483 + $0x9c] sm:$0xf]
        %v511 = vld [vmem:[%s483 + $0xa0] sm:$0xf]
        %v512 = vld [vmem:[%s483 + $0xa8] sm:$0xf]
        %v513 = vld [vmem:[%s483 + $0xac] sm:$0xf]
        %v514 = vld [vmem:[%s483 + $0xb4] sm:$0xf]
        %v515 = vld [vmem:[%s483 + $0xb8] sm:$0xf]
        %v516 = vunpack.c.l.bf16 %v484
        %v517 = vunpack.c.l.bf16 %v485
        %v518 = vunpack.c.l.bf16 %v486
        %v519 = vunpack.c.l.bf16 %v487
        %v520 = vunpack.c.l.bf16 %v488
        %v521 = vunpack.c.l.bf16 %v489
        %v522 = vunpack.c.l.bf16 %v490
        %v523 = vunpack.c.l.bf16 %v491
        %v524 = vunpack.c.l.bf16 %v492
        %v525 = vunpack.c.l.bf16 %v493
        %v526 = vunpack.c.l.bf16 %v494
        %v527 = vunpack.c.l.bf16 %v495
        %v528 = vunpack.c.l.bf16 %v496
        %v529 = vunpack.c.l.bf16 %v497
        %v530 = vunpack.c.l.bf16 %v498
        %v531 = vunpack.c.l.bf16 %v499
        %v532 = vunpack.c.l.bf16 %v500
        %v533 = vunpack.c.l.bf16 %v501
        %v534 = vunpack.c.l.bf16 %v502
        %v535 = vunpack.c.l.bf16 %v503
        %v536 = vunpack.c.l.bf16 %v504
        %v537 = vunpack.c.l.bf16 %v505
        %v538 = vunpack.c.l.bf16 %v506
        %v539 = vunpack.c.l.bf16 %v507
        %v540 = vunpack.c.l.bf16 %v508
        %v541 = vunpack.c.l.bf16 %v509
        %v542 = vunpack.c.l.bf16 %v510
        %v543 = vunpack.c.l.bf16 %v511
        %v544 = vunpack.c.l.bf16 %v512
        %v545 = vunpack.c.l.bf16 %v513
        %v546 = vunpack.c.l.bf16 %v514
        %v547 = vunpack.c.l.bf16 %v515
        %v548 = vld [vmem:[%s483 + $0x8] sm:$0x1]
        %v549 = vld [vmem:[%s483 + $0x14] sm:$0x1]
        %v550 = vld [vmem:[%s483 + $0x20] sm:$0x1]
        %v551 = vld [vmem:[%s483 + $0x2c] sm:$0x1]
        %v552 = vld [vmem:[%s483 + $0x38] sm:$0x1]
        %v553 = vld [vmem:[%s483 + $0x44] sm:$0x1]
        %v554 = vld [vmem:[%s483 + $0x50] sm:$0x1]
        %v555 = vld [vmem:[%s483 + $0x5c] sm:$0x1]
        %v556 = vld [vmem:[%s483 + $0x68] sm:$0x1]
        %v557 = vld [vmem:[%s483 + $0x74] sm:$0x1]
        %v558 = vld [vmem:[%s483 + $0x80] sm:$0x1]
        %v559 = vld [vmem:[%s483 + $0x8c] sm:$0x1]
        %v560 = vld [vmem:[%s483 + $0x98] sm:$0x1]
        %v561 = vld [vmem:[%s483 + $0xa4] sm:$0x1]
        %v562 = vld [vmem:[%s483 + $0xb0] sm:$0x1]
        %v563 = vld [vmem:[%s483 + $0xbc] sm:$0x1]
        %v564 = vunpack.c.l.bf16 %v548
        %v565 = vunpack.c.l.bf16 %v549
        %v566 = vunpack.c.l.bf16 %v550
        %v567 = vunpack.c.l.bf16 %v551
        %v568 = vunpack.c.l.bf16 %v552
        %v569 = vunpack.c.l.bf16 %v553
        %v570 = vunpack.c.l.bf16 %v554
        %v571 = vunpack.c.l.bf16 %v555
        %v572 = vunpack.c.l.bf16 %v556
        %v573 = vunpack.c.l.bf16 %v557
        %v574 = vunpack.c.l.bf16 %v558
        %v575 = vunpack.c.l.bf16 %v559
        %v576 = vunpack.c.l.bf16 %v560
        %v577 = vunpack.c.l.bf16 %v561
        %v578 = vunpack.c.l.bf16 %v562
        %v579 = vunpack.c.l.bf16 %v563
        %v580 = vld [vmem:[%s483] sm:$0xe]
        %v581 = vld [vmem:[%s483 + $0xc] sm:$0xe]
        %v582 = vld [vmem:[%s483 + $0x18] sm:$0xe]
        %v583 = vld [vmem:[%s483 + $0x24] sm:$0xe]
        %v584 = vld [vmem:[%s483 + $0x30] sm:$0xe]
        %v585 = vld [vmem:[%s483 + $0x3c] sm:$0xe]
        %v586 = vld [vmem:[%s483 + $0x48] sm:$0xe]
        %v587 = vld [vmem:[%s483 + $0x54] sm:$0xe]
        %v588 = vld [vmem:[%s483 + $0x60] sm:$0xe]
        %v589 = vld [vmem:[%s483 + $0x6c] sm:$0xe]
        %v590 = vld [vmem:[%s483 + $0x78] sm:$0xe]
        %v591 = vld [vmem:[%s483 + $0x84] sm:$0xe]
        %v592 = vld [vmem:[%s483 + $0x90] sm:$0xe]
        %v593 = vld [vmem:[%s483 + $0x9c] sm:$0xe]
        %v594 = vld [vmem:[%s483 + $0xa8] sm:$0xe]
        %v595 = vld [vmem:[%s483 + $0xb4] sm:$0xe]
        %v596 = vunpack.c.l.bf16 %v580
        %v597 = vunpack.c.l.bf16 %v581
        %v598 = vunpack.c.l.bf16 %v582
        %v599 = vunpack.c.l.bf16 %v583
        %v600 = vunpack.c.l.bf16 %v584
        %v601 = vunpack.c.l.bf16 %v585
        %v602 = vunpack.c.l.bf16 %v586
        %v603 = vunpack.c.l.bf16 %v587
        %v604 = vunpack.c.l.bf16 %v588
        %v605 = vunpack.c.l.bf16 %v589
        %v606 = vunpack.c.l.bf16 %v590
        %v607 = vunpack.c.l.bf16 %v591
        %v608 = vunpack.c.l.bf16 %v592
        %v609 = vunpack.c.l.bf16 %v593
        %v610 = vunpack.c.l.bf16 %v594
        %v611 = vunpack.c.l.bf16 %v595
        %vm660 = vcmask 1046528
        %v661 = vrot.slane %v258, 1
        %v662 = vrot.slane %v259, 1
        %v663 = vsel %vm660, %v661, %v662
        %v664 = vrot.slane %v306, 1
        %v665 = vsel %vm660, %v662, %v664
        %v666 = vrot.slane %v260, 1
        %v667 = vrot.slane %v261, 1
        %v668 = vsel %vm660, %v666, %v667
        %v669 = vrot.slane %v307, 1
        %v670 = vsel %vm660, %v667, %v669
        %v671 = vrot.slane %v262, 1
        %v672 = vrot.slane %v263, 1
        %v673 = vsel %vm660, %v671, %v672
        %v674 = vrot.slane %v308, 1
        %v675 = vsel %vm660, %v672, %v674
        %v676 = vrot.slane %v264, 1
        %v677 = vrot.slane %v265, 1
        %v678 = vsel %vm660, %v676, %v677
        %v679 = vrot.slane %v309, 1
        %v680 = vsel %vm660, %v677, %v679
        %v681 = vrot.slane %v266, 1
        %v682 = vrot.slane %v267, 1
        %v683 = vsel %vm660, %v681, %v682
        %v684 = vrot.slane %v310, 1
        %v685 = vsel %vm660, %v682, %v684
        %v686 = vrot.slane %v268, 1
        %v687 = vrot.slane %v269, 1
        %v688 = vsel %vm660, %v686, %v687
        %v689 = vrot.slane %v311, 1
        %v690 = vsel %vm660, %v687, %v689
        %v691 = vrot.slane %v270, 1
        %v692 = vrot.slane %v271, 1
        %v693 = vsel %vm660, %v691, %v692
        %v694 = vrot.slane %v312, 1
        %v695 = vsel %vm660, %v692, %v694
        %v696 = vrot.slane %v272, 1
        %v697 = vrot.slane %v273, 1
        %v698 = vsel %vm660, %v696, %v697
        %v699 = vrot.slane %v313, 1
        %v700 = vsel %vm660, %v697, %v699
        %v701 = vrot.slane %v274, 1
        %v702 = vrot.slane %v275, 1
        %v703 = vsel %vm660, %v701, %v702
        %v704 = vrot.slane %v314, 1
        %v705 = vsel %vm660, %v702, %v704
        %v706 = vrot.slane %v276, 1
        %v707 = vrot.slane %v277, 1
        %v708 = vsel %vm660, %v706, %v707
        %v709 = vrot.slane %v315, 1
        %v710 = vsel %vm660, %v707, %v709
        %v711 = vrot.slane %v278, 1
        %v712 = vrot.slane %v279, 1
        %v713 = vsel %vm660, %v711, %v712
        %v714 = vrot.slane %v316, 1
        %v715 = vsel %vm660, %v712, %v714
        %v716 = vrot.slane %v280, 1
        %v717 = vrot.slane %v281, 1
        %v718 = vsel %vm660, %v716, %v717
        %v719 = vrot.slane %v317, 1
        %v720 = vsel %vm660, %v717, %v719
        %v721 = vrot.slane %v282, 1
        %v722 = vrot.slane %v283, 1
        %v723 = vsel %vm660, %v721, %v722
        %v724 = vrot.slane %v318, 1
        %v725 = vsel %vm660, %v722, %v724
        %v726 = vrot.slane %v284, 1
        %v727 = vrot.slane %v285, 1
        %v728 = vsel %vm660, %v726, %v727
        %v729 = vrot.slane %v319, 1
        %v730 = vsel %vm660, %v727, %v729
        %v731 = vrot.slane %v286, 1
        %v732 = vrot.slane %v287, 1
        %v733 = vsel %vm660, %v731, %v732
        %v734 = vrot.slane %v320, 1
        %v735 = vsel %vm660, %v732, %v734
        %v736 = vrot.slane %v288, 1
        %v737 = vrot.slane %v289, 1
        %v738 = vsel %vm660, %v736, %v737
        %v739 = vrot.slane %v321, 1
        %v740 = vsel %vm660, %v737, %v739
        %741 = vrot.lane.b32.xlu0 %v663, 4
        %v742 = vpop.permute.xlu0 %741
        %743 = vrot.lane.b32.xlu0 %v665, 4
        %v744 = vpop.permute.xlu0 %743
        %745 = vrot.lane.b32.xlu0 %v668, 4
        %v746 = vpop.permute.xlu0 %745
        %747 = vrot.lane.b32.xlu0 %v670, 4
        %v748 = vpop.permute.xlu0 %747
        %749 = vrot.lane.b32.xlu0 %v673, 4
        %v750 = vpop.permute.xlu0 %749
        %751 = vrot.lane.b32.xlu0 %v675, 4
        %v752 = vpop.permute.xlu0 %751
        %753 = vrot.lane.b32.xlu0 %v678, 4
        %v754 = vpop.permute.xlu0 %753
        %755 = vrot.lane.b32.xlu0 %v680, 4
        %v756 = vpop.permute.xlu0 %755
        %757 = vrot.lane.b32.xlu0 %v683, 4
        %v758 = vpop.permute.xlu0 %757
        %759 = vrot.lane.b32.xlu0 %v685, 4
        %v760 = vpop.permute.xlu0 %759
        %761 = vrot.lane.b32.xlu0 %v688, 4
        %v762 = vpop.permute.xlu0 %761
        %763 = vrot.lane.b32.xlu0 %v690, 4
        %v764 = vpop.permute.xlu0 %763
        %765 = vrot.lane.b32.xlu0 %v693, 4
        %v766 = vpop.permute.xlu0 %765
        %767 = vrot.lane.b32.xlu0 %v695, 4
        %v768 = vpop.permute.xlu0 %767
        %769 = vrot.lane.b32.xlu0 %v698, 4
        %v770 = vpop.permute.xlu0 %769
        %771 = vrot.lane.b32.xlu0 %v700, 4
        %v772 = vpop.permute.xlu0 %771
        %773 = vrot.lane.b32.xlu0 %v703, 4
        %v774 = vpop.permute.xlu0 %773
        %775 = vrot.lane.b32.xlu0 %v705, 4
        %v776 = vpop.permute.xlu0 %775
        %777 = vrot.lane.b32.xlu0 %v708, 4
        %v778 = vpop.permute.xlu0 %777
        %779 = vrot.lane.b32.xlu0 %v710, 4
        %v780 = vpop.permute.xlu0 %779
        %781 = vrot.lane.b32.xlu0 %v713, 4
        %v782 = vpop.permute.xlu0 %781
        %783 = vrot.lane.b32.xlu0 %v715, 4
        %v784 = vpop.permute.xlu0 %783
        %785 = vrot.lane.b32.xlu0 %v718, 4
        %v786 = vpop.permute.xlu0 %785
        %787 = vrot.lane.b32.xlu0 %v720, 4
        %v788 = vpop.permute.xlu0 %787
        %789 = vrot.lane.b32.xlu0 %v723, 4
        %v790 = vpop.permute.xlu0 %789
        %791 = vrot.lane.b32.xlu0 %v725, 4
        %v792 = vpop.permute.xlu0 %791
        %793 = vrot.lane.b32.xlu0 %v728, 4
        %v794 = vpop.permute.xlu0 %793
        %795 = vrot.lane.b32.xlu0 %v730, 4
        %v796 = vpop.permute.xlu0 %795
        %797 = vrot.lane.b32.xlu0 %v733, 4
        %v798 = vpop.permute.xlu0 %797
        %799 = vrot.lane.b32.xlu0 %v735, 4
        %v800 = vpop.permute.xlu0 %799
        %801 = vrot.lane.b32.xlu0 %v738, 4
        %v802 = vpop.permute.xlu0 %801
        %803 = vrot.lane.b32.xlu0 %v740, 4
        %v804 = vpop.permute.xlu0 %803
        %vm853 = vcmask 1045504
        %v854 = vrot.slane %v338, 2
        %v855 = vrot.slane %v259, 2
        %v856 = vsel %vm853, %v854, %v855
        %v857 = vrot.slane %v306, 2
        %v858 = vsel %vm853, %v855, %v857
        %v859 = vrot.slane %v339, 2
        %v860 = vrot.slane %v261, 2
        %v861 = vsel %vm853, %v859, %v860
        %v862 = vrot.slane %v307, 2
        %v863 = vsel %vm853, %v860, %v862
        %v864 = vrot.slane %v340, 2
        %v865 = vrot.slane %v263, 2
        %v866 = vsel %vm853, %v864, %v865
        %v867 = vrot.slane %v308, 2
        %v868 = vsel %vm853, %v865, %v867
        %v869 = vrot.slane %v341, 2
        %v870 = vrot.slane %v265, 2
        %v871 = vsel %vm853, %v869, %v870
        %v872 = vrot.slane %v309, 2
        %v873 = vsel %vm853, %v870, %v872
        %v874 = vrot.slane %v342, 2
        %v875 = vrot.slane %v267, 2
        %v876 = vsel %vm853, %v874, %v875
        %v877 = vrot.slane %v310, 2
        %v878 = vsel %vm853, %v875, %v877
        %v879 = vrot.slane %v343, 2
        %v880 = vrot.slane %v269, 2
        %v881 = vsel %vm853, %v879, %v880
        %v882 = vrot.slane %v311, 2
        %v883 = vsel %vm853, %v880, %v882
        %v884 = vrot.slane %v344, 2
        %v885 = vrot.slane %v271, 2
        %v886 = vsel %vm853, %v884, %v885
        %v887 = vrot.slane %v312, 2
        %v888 = vsel %vm853, %v885, %v887
        %v889 = vrot.slane %v345, 2
        %v890 = vrot.slane %v273, 2
        %v891 = vsel %vm853, %v889, %v890
        %v892 = vrot.slane %v313, 2
        %v893 = vsel %vm853, %v890, %v892
        %v894 = vrot.slane %v346, 2
        %v895 = vrot.slane %v275, 2
        %v896 = vsel %vm853, %v894, %v895
        %v897 = vrot.slane %v314, 2
        %v898 = vsel %vm853, %v895, %v897
        %v899 = vrot.slane %v347, 2
        %v900 = vrot.slane %v277, 2
        %v901 = vsel %vm853, %v899, %v900
        %v902 = vrot.slane %v315, 2
        %v903 = vsel %vm853, %v900, %v902
        %v904 = vrot.slane %v348, 2
        %v905 = vrot.slane %v279, 2
        %v906 = vsel %vm853, %v904, %v905
        %v907 = vrot.slane %v316, 2
        %v908 = vsel %vm853, %v905, %v907
        %v909 = vrot.slane %v349, 2
        %v910 = vrot.slane %v281, 2
        %v911 = vsel %vm853, %v909, %v910
        %v912 = vrot.slane %v317, 2
        %v913 = vsel %vm853, %v910, %v912
        %v914 = vrot.slane %v350, 2
        %v915 = vrot.slane %v283, 2
        %v916 = vsel %vm853, %v914, %v915
        %v917 = vrot.slane %v318, 2
        %v918 = vsel %vm853, %v915, %v917
        %v919 = vrot.slane %v351, 2
        %v920 = vrot.slane %v285, 2
        %v921 = vsel %vm853, %v919, %v920
        %v922 = vrot.slane %v319, 2
        %v923 = vsel %vm853, %v920, %v922
        %v924 = vrot.slane %v352, 2
        %v925 = vrot.slane %v287, 2
        %v926 = vsel %vm853, %v924, %v925
        %v927 = vrot.slane %v320, 2
        %v928 = vsel %vm853, %v925, %v927
        %v929 = vrot.slane %v353, 2
        %v930 = vrot.slane %v289, 2
        %v931 = vsel %vm853, %v929, %v930
        %v932 = vrot.slane %v321, 2
        %v933 = vsel %vm853, %v930, %v932
        %934 = vrot.lane.b32.xlu0 %v856, 8
        %v935 = vpop.permute.xlu0 %934
        %936 = vrot.lane.b32.xlu0 %v858, 8
        %v937 = vpop.permute.xlu0 %936
        %938 = vrot.lane.b32.xlu0 %v861, 8
        %v939 = vpop.permute.xlu0 %938
        %940 = vrot.lane.b32.xlu0 %v863, 8
        %v941 = vpop.permute.xlu0 %940
        %942 = vrot.lane.b32.xlu0 %v866, 8
        %v943 = vpop.permute.xlu0 %942
        %944 = vrot.lane.b32.xlu0 %v868, 8
        %v945 = vpop.permute.xlu0 %944
        %946 = vrot.lane.b32.xlu0 %v871, 8
        %v947 = vpop.permute.xlu0 %946
        %948 = vrot.lane.b32.xlu0 %v873, 8
        %v949 = vpop.permute.xlu0 %948
        %950 = vrot.lane.b32.xlu0 %v876, 8
        %v951 = vpop.permute.xlu0 %950
        %952 = vrot.lane.b32.xlu0 %v878, 8
        %v953 = vpop.permute.xlu0 %952
        %954 = vrot.lane.b32.xlu0 %v881, 8
        %v955 = vpop.permute.xlu0 %954
        %956 = vrot.lane.b32.xlu0 %v883, 8
        %v957 = vpop.permute.xlu0 %956
        %958 = vrot.lane.b32.xlu0 %v886, 8
        %v959 = vpop.permute.xlu0 %958
        %960 = vrot.lane.b32.xlu0 %v888, 8
        %v961 = vpop.permute.xlu0 %960
        %962 = vrot.lane.b32.xlu0 %v891, 8
        %v963 = vpop.permute.xlu0 %962
        %964 = vrot.lane.b32.xlu0 %v893, 8
        %v965 = vpop.permute.xlu0 %964
        %966 = vrot.lane.b32.xlu0 %v896, 8
        %v967 = vpop.permute.xlu0 %966
        %968 = vrot.lane.b32.xlu0 %v898, 8
        %v969 = vpop.permute.xlu0 %968
        %970 = vrot.lane.b32.xlu0 %v901, 8
        %v971 = vpop.permute.xlu0 %970
        %972 = vrot.lane.b32.xlu0 %v903, 8
        %v973 = vpop.permute.xlu0 %972
        %974 = vrot.lane.b32.xlu0 %v906, 8
        %v975 = vpop.permute.xlu0 %974
        %976 = vrot.lane.b32.xlu0 %v908, 8
        %v977 = vpop.permute.xlu0 %976
        %978 = vrot.lane.b32.xlu0 %v911, 8
        %v979 = vpop.permute.xlu0 %978
        %980 = vrot.lane.b32.xlu0 %v913, 8
        %v981 = vpop.permute.xlu0 %980
        %982 = vrot.lane.b32.xlu0 %v916, 8
        %v983 = vpop.permute.xlu0 %982
        %984 = vrot.lane.b32.xlu0 %v918, 8
        %v985 = vpop.permute.xlu0 %984
        %986 = vrot.lane.b32.xlu0 %v921, 8
        %v987 = vpop.permute.xlu0 %986
        %988 = vrot.lane.b32.xlu0 %v923, 8
        %v989 = vpop.permute.xlu0 %988
        %990 = vrot.lane.b32.xlu0 %v926, 8
        %v991 = vpop.permute.xlu0 %990
        %992 = vrot.lane.b32.xlu0 %v928, 8
        %v993 = vpop.permute.xlu0 %992
        %994 = vrot.lane.b32.xlu0 %v931, 8
        %v995 = vpop.permute.xlu0 %994
        %996 = vrot.lane.b32.xlu0 %v933, 8
        %v997 = vpop.permute.xlu0 %996
        %1062 = vrot.lane.b32.xlu0 %v387, 12
        %v1063 = vpop.permute.xlu0 %1062
        %1064 = vrot.lane.b32.xlu0 %v388, 12
        %v1065 = vpop.permute.xlu0 %1064
        %1066 = vrot.lane.b32.xlu0 %v389, 12
        %v1067 = vpop.permute.xlu0 %1066
        %1068 = vrot.lane.b32.xlu0 %v390, 12
        %v1069 = vpop.permute.xlu0 %1068
        %1070 = vrot.lane.b32.xlu0 %v391, 12
        %v1071 = vpop.permute.xlu0 %1070
        %1072 = vrot.lane.b32.xlu0 %v392, 12
        %v1073 = vpop.permute.xlu0 %1072
        %1074 = vrot.lane.b32.xlu0 %v393, 12
        %v1075 = vpop.permute.xlu0 %1074
        %1076 = vrot.lane.b32.xlu0 %v394, 12
        %v1077 = vpop.permute.xlu0 %1076
        %1078 = vrot.lane.b32.xlu0 %v395, 12
        %v1079 = vpop.permute.xlu0 %1078
        %1080 = vrot.lane.b32.xlu0 %v396, 12
        %v1081 = vpop.permute.xlu0 %1080
        %1082 = vrot.lane.b32.xlu0 %v397, 12
        %v1083 = vpop.permute.xlu0 %1082
        %1084 = vrot.lane.b32.xlu0 %v398, 12
        %v1085 = vpop.permute.xlu0 %1084
        %1086 = vrot.lane.b32.xlu0 %v399, 12
        %v1087 = vpop.permute.xlu0 %1086
        %1088 = vrot.lane.b32.xlu0 %v400, 12
        %v1089 = vpop.permute.xlu0 %1088
        %1090 = vrot.lane.b32.xlu0 %v401, 12
        %v1091 = vpop.permute.xlu0 %1090
        %1092 = vrot.lane.b32.xlu0 %v402, 12
        %v1093 = vpop.permute.xlu0 %1092
        %1094 = vrot.lane.b32.xlu0 %v403, 12
        %v1095 = vpop.permute.xlu0 %1094
        %1096 = vrot.lane.b32.xlu0 %v404, 12
        %v1097 = vpop.permute.xlu0 %1096
        %1098 = vrot.lane.b32.xlu0 %v405, 12
        %v1099 = vpop.permute.xlu0 %1098
        %1100 = vrot.lane.b32.xlu0 %v406, 12
        %v1101 = vpop.permute.xlu0 %1100
        %1102 = vrot.lane.b32.xlu0 %v407, 12
        %v1103 = vpop.permute.xlu0 %1102
        %1104 = vrot.lane.b32.xlu0 %v408, 12
        %v1105 = vpop.permute.xlu0 %1104
        %1106 = vrot.lane.b32.xlu0 %v409, 12
        %v1107 = vpop.permute.xlu0 %1106
        %1108 = vrot.lane.b32.xlu0 %v410, 12
        %v1109 = vpop.permute.xlu0 %1108
        %1110 = vrot.lane.b32.xlu0 %v411, 12
        %v1111 = vpop.permute.xlu0 %1110
        %1112 = vrot.lane.b32.xlu0 %v412, 12
        %v1113 = vpop.permute.xlu0 %1112
        %1114 = vrot.lane.b32.xlu0 %v413, 12
        %v1115 = vpop.permute.xlu0 %1114
        %1116 = vrot.lane.b32.xlu0 %v414, 12
        %v1117 = vpop.permute.xlu0 %1116
        %1118 = vrot.lane.b32.xlu0 %v415, 12
        %v1119 = vpop.permute.xlu0 %1118
        %1120 = vrot.lane.b32.xlu0 %v416, 12
        %v1121 = vpop.permute.xlu0 %1120
        %1122 = vrot.lane.b32.xlu0 %v417, 12
        %v1123 = vpop.permute.xlu0 %1122
        %1124 = vrot.lane.b32.xlu0 %v418, 12
        %v1125 = vpop.permute.xlu0 %1124
        %v1174 = vrot.slane %v387, 1
        %v1175 = vrot.slane %v388, 1
        %v1176 = vsel %vm660, %v1174, %v1175
        %v1177 = vrot.slane %v435, 1
        %v1178 = vsel %vm660, %v1175, %v1177
        %v1179 = vrot.slane %v389, 1
        %v1180 = vrot.slane %v390, 1
        %v1181 = vsel %vm660, %v1179, %v1180
        %v1182 = vrot.slane %v436, 1
        %v1183 = vsel %vm660, %v1180, %v1182
        %v1184 = vrot.slane %v391, 1
        %v1185 = vrot.slane %v392, 1
        %v1186 = vsel %vm660, %v1184, %v1185
        %v1187 = vrot.slane %v437, 1
        %v1188 = vsel %vm660, %v1185, %v1187
        %v1189 = vrot.slane %v393, 1
        %v1190 = vrot.slane %v394, 1
        %v1191 = vsel %vm660, %v1189, %v1190
        %v1192 = vrot.slane %v438, 1
        %v1193 = vsel %vm660, %v1190, %v1192
        %v1194 = vrot.slane %v395, 1
        %v1195 = vrot.slane %v396, 1
        %v1196 = vsel %vm660, %v1194, %v1195
        %v1197 = vrot.slane %v439, 1
        %v1198 = vsel %vm660, %v1195, %v1197
        %v1199 = vrot.slane %v397, 1
        %v1200 = vrot.slane %v398, 1
        %v1201 = vsel %vm660, %v1199, %v1200
        %v1202 = vrot.slane %v440, 1
        %v1203 = vsel %vm660, %v1200, %v1202
        %v1204 = vrot.slane %v399, 1
        %v1205 = vrot.slane %v400, 1
        %v1206 = vsel %vm660, %v1204, %v1205
        %v1207 = vrot.slane %v441, 1
        %v1208 = vsel %vm660, %v1205, %v1207
        %v1209 = vrot.slane %v401, 1
        %v1210 = vrot.slane %v402, 1
        %v1211 = vsel %vm660, %v1209, %v1210
        %v1212 = vrot.slane %v442, 1
        %v1213 = vsel %vm660, %v1210, %v1212
        %v1214 = vrot.slane %v403, 1
        %v1215 = vrot.slane %v404, 1
        %v1216 = vsel %vm660, %v1214, %v1215
        %v1217 = vrot.slane %v443, 1
        %v1218 = vsel %vm660, %v1215, %v1217
        %v1219 = vrot.slane %v405, 1
        %v1220 = vrot.slane %v406, 1
        %v1221 = vsel %vm660, %v1219, %v1220
        %v1222 = vrot.slane %v444, 1
        %v1223 = vsel %vm660, %v1220, %v1222
        %v1224 = vrot.slane %v407, 1
        %v1225 = vrot.slane %v408, 1
        %v1226 = vsel %vm660, %v1224, %v1225
        %v1227 = vrot.slane %v445, 1
        %v1228 = vsel %vm660, %v1225, %v1227
        %v1229 = vrot.slane %v409, 1
        %v1230 = vrot.slane %v410, 1
        %v1231 = vsel %vm660, %v1229, %v1230
        %v1232 = vrot.slane %v446, 1
        %v1233 = vsel %vm660, %v1230, %v1232
        %v1234 = vrot.slane %v411, 1
        %v1235 = vrot.slane %v412, 1
        %v1236 = vsel %vm660, %v1234, %v1235
        %v1237 = vrot.slane %v447, 1
        %v1238 = vsel %vm660, %v1235, %v1237
        %v1239 = vrot.slane %v413, 1
        %v1240 = vrot.slane %v414, 1
        %v1241 = vsel %vm660, %v1239, %v1240
        %v1242 = vrot.slane %v448, 1
        %v1243 = vsel %vm660, %v1240, %v1242
        %v1244 = vrot.slane %v415, 1
        %v1245 = vrot.slane %v416, 1
        %v1246 = vsel %vm660, %v1244, %v1245
        %v1247 = vrot.slane %v449, 1
        %v1248 = vsel %vm660, %v1245, %v1247
        %v1249 = vrot.slane %v417, 1
        %v1250 = vrot.slane %v418, 1
        %v1251 = vsel %vm660, %v1249, %v1250
        %v1252 = vrot.slane %v450, 1
        %v1253 = vsel %vm660, %v1250, %v1252
        %1254 = vrot.lane.b32.xlu0 %v1176, 16
        %v1255 = vpop.permute.xlu0 %1254
        %1256 = vrot.lane.b32.xlu0 %v1178, 16
        %v1257 = vpop.permute.xlu0 %1256
        %1258 = vrot.lane.b32.xlu0 %v1181, 16
        %v1259 = vpop.permute.xlu0 %1258
        %1260 = vrot.lane.b32.xlu0 %v1183, 16
        %v1261 = vpop.permute.xlu0 %1260
        %1262 = vrot.lane.b32.xlu0 %v1186, 16
        %v1263 = vpop.permute.xlu0 %1262
        %1264 = vrot.lane.b32.xlu0 %v1188, 16
        %v1265 = vpop.permute.xlu0 %1264
        %1266 = vrot.lane.b32.xlu0 %v1191, 16
        %v1267 = vpop.permute.xlu0 %1266
        %1268 = vrot.lane.b32.xlu0 %v1193, 16
        %v1269 = vpop.permute.xlu0 %1268
        %1270 = vrot.lane.b32.xlu0 %v1196, 16
        %v1271 = vpop.permute.xlu0 %1270
        %1272 = vrot.lane.b32.xlu0 %v1198, 16
        %v1273 = vpop.permute.xlu0 %1272
        %1274 = vrot.lane.b32.xlu0 %v1201, 16
        %v1275 = vpop.permute.xlu0 %1274
        %1276 = vrot.lane.b32.xlu0 %v1203, 16
        %v1277 = vpop.permute.xlu0 %1276
        %1278 = vrot.lane.b32.xlu0 %v1206, 16
        %v1279 = vpop.permute.xlu0 %1278
        %1280 = vrot.lane.b32.xlu0 %v1208, 16
        %v1281 = vpop.permute.xlu0 %1280
        %1282 = vrot.lane.b32.xlu0 %v1211, 16
        %v1283 = vpop.permute.xlu0 %1282
        %1284 = vrot.lane.b32.xlu0 %v1213, 16
        %v1285 = vpop.permute.xlu0 %1284
        %1286 = vrot.lane.b32.xlu0 %v1216, 16
        %v1287 = vpop.permute.xlu0 %1286
        %1288 = vrot.lane.b32.xlu0 %v1218, 16
        %v1289 = vpop.permute.xlu0 %1288
        %1290 = vrot.lane.b32.xlu0 %v1221, 16
        %v1291 = vpop.permute.xlu0 %1290
        %1292 = vrot.lane.b32.xlu0 %v1223, 16
        %v1293 = vpop.permute.xlu0 %1292
        %1294 = vrot.lane.b32.xlu0 %v1226, 16
        %v1295 = vpop.permute.xlu0 %1294
        %1296 = vrot.lane.b32.xlu0 %v1228, 16
        %v1297 = vpop.permute.xlu0 %1296
        %1298 = vrot.lane.b32.xlu0 %v1231, 16
        %v1299 = vpop.permute.xlu0 %1298
        %1300 = vrot.lane.b32.xlu0 %v1233, 16
        %v1301 = vpop.permute.xlu0 %1300
        %1302 = vrot.lane.b32.xlu0 %v1236, 16
        %v1303 = vpop.permute.xlu0 %1302
        %1304 = vrot.lane.b32.xlu0 %v1238, 16
        %v1305 = vpop.permute.xlu0 %1304
        %1306 = vrot.lane.b32.xlu0 %v1241, 16
        %v1307 = vpop.permute.xlu0 %1306
        %1308 = vrot.lane.b32.xlu0 %v1243, 16
        %v1309 = vpop.permute.xlu0 %1308
        %1310 = vrot.lane.b32.xlu0 %v1246, 16
        %v1311 = vpop.permute.xlu0 %1310
        %1312 = vrot.lane.b32.xlu0 %v1248, 16
        %v1313 = vpop.permute.xlu0 %1312
        %1314 = vrot.lane.b32.xlu0 %v1251, 16
        %v1315 = vpop.permute.xlu0 %1314
        %1316 = vrot.lane.b32.xlu0 %v1253, 16
        %v1317 = vpop.permute.xlu0 %1316
        %v1366 = vrot.slane %v467, 2
        %v1367 = vrot.slane %v388, 2
        %v1368 = vsel %vm853, %v1366, %v1367
        %v1369 = vrot.slane %v435, 2
        %v1370 = vsel %vm853, %v1367, %v1369
        %v1371 = vrot.slane %v468, 2
        %v1372 = vrot.slane %v390, 2
        %v1373 = vsel %vm853, %v1371, %v1372
        %v1374 = vrot.slane %v436, 2
        %v1375 = vsel %vm853, %v1372, %v1374
        %v1376 = vrot.slane %v469, 2
        %v1377 = vrot.slane %v392, 2
        %v1378 = vsel %vm853, %v1376, %v1377
        %v1379 = vrot.slane %v437, 2
        %v1380 = vsel %vm853, %v1377, %v1379
        %v1381 = vrot.slane %v470, 2
        %v1382 = vrot.slane %v394, 2
        %v1383 = vsel %vm853, %v1381, %v1382
        %v1384 = vrot.slane %v438, 2
        %v1385 = vsel %vm853, %v1382, %v1384
        %v1386 = vrot.slane %v471, 2
        %v1387 = vrot.slane %v396, 2
        %v1388 = vsel %vm853, %v1386, %v1387
        %v1389 = vrot.slane %v439, 2
        %v1390 = vsel %vm853, %v1387, %v1389
        %v1391 = vrot.slane %v472, 2
        %v1392 = vrot.slane %v398, 2
        %v1393 = vsel %vm853, %v1391, %v1392
        %v1394 = vrot.slane %v440, 2
        %v1395 = vsel %vm853, %v1392, %v1394
        %v1396 = vrot.slane %v473, 2
        %v1397 = vrot.slane %v400, 2
        %v1398 = vsel %vm853, %v1396, %v1397
        %v1399 = vrot.slane %v441, 2
        %v1400 = vsel %vm853, %v1397, %v1399
        %v1401 = vrot.slane %v474, 2
        %v1402 = vrot.slane %v402, 2
        %v1403 = vsel %vm853, %v1401, %v1402
        %v1404 = vrot.slane %v442, 2
        %v1405 = vsel %vm853, %v1402, %v1404
        %v1406 = vrot.slane %v475, 2
        %v1407 = vrot.slane %v404, 2
        %v1408 = vsel %vm853, %v1406, %v1407
        %v1409 = vrot.slane %v443, 2
        %v1410 = vsel %vm853, %v1407, %v1409
        %v1411 = vrot.slane %v476, 2
        %v1412 = vrot.slane %v406, 2
        %v1413 = vsel %vm853, %v1411, %v1412
        %v1414 = vrot.slane %v444, 2
        %v1415 = vsel %vm853, %v1412, %v1414
        %v1416 = vrot.slane %v477, 2
        %v1417 = vrot.slane %v408, 2
        %v1418 = vsel %vm853, %v1416, %v1417
        %v1419 = vrot.slane %v445, 2
        %v1420 = vsel %vm853, %v1417, %v1419
        %v1421 = vrot.slane %v478, 2
        %v1422 = vrot.slane %v410, 2
        %v1423 = vsel %vm853, %v1421, %v1422
        %v1424 = vrot.slane %v446, 2
        %v1425 = vsel %vm853, %v1422, %v1424
        %v1426 = vrot.slane %v479, 2
        %v1427 = vrot.slane %v412, 2
        %v1428 = vsel %vm853, %v1426, %v1427
        %v1429 = vrot.slane %v447, 2
        %v1430 = vsel %vm853, %v1427, %v1429
        %v1431 = vrot.slane %v480, 2
        %v1432 = vrot.slane %v414, 2
        %v1433 = vsel %vm853, %v1431, %v1432
        %v1434 = vrot.slane %v448, 2
        %v1435 = vsel %vm853, %v1432, %v1434
        %v1436 = vrot.slane %v481, 2
        %v1437 = vrot.slane %v416, 2
        %v1438 = vsel %vm853, %v1436, %v1437
        %v1439 = vrot.slane %v449, 2
        %v1440 = vsel %vm853, %v1437, %v1439
        %v1441 = vrot.slane %v482, 2
        %v1442 = vrot.slane %v418, 2
        %v1443 = vsel %vm853, %v1441, %v1442
        %v1444 = vrot.slane %v450, 2
        %v1445 = vsel %vm853, %v1442, %v1444
        %1446 = vrot.lane.b32.xlu0 %v1368, 20
        %v1447 = vpop.permute.xlu0 %1446
        %1448 = vrot.lane.b32.xlu0 %v1370, 20
        %v1449 = vpop.permute.xlu0 %1448
        %1450 = vrot.lane.b32.xlu0 %v1373, 20
        %v1451 = vpop.permute.xlu0 %1450
        %1452 = vrot.lane.b32.xlu0 %v1375, 20
        %v1453 = vpop.permute.xlu0 %1452
        %1454 = vrot.lane.b32.xlu0 %v1378, 20
        %v1455 = vpop.permute.xlu0 %1454
        %1456 = vrot.lane.b32.xlu0 %v1380, 20
        %v1457 = vpop.permute.xlu0 %1456
        %1458 = vrot.lane.b32.xlu0 %v1383, 20
        %v1459 = vpop.permute.xlu0 %1458
        %1460 = vrot.lane.b32.xlu0 %v1385, 20
        %v1461 = vpop.permute.xlu0 %1460
        %1462 = vrot.lane.b32.xlu0 %v1388, 20
        %v1463 = vpop.permute.xlu0 %1462
        %1464 = vrot.lane.b32.xlu0 %v1390, 20
        %v1465 = vpop.permute.xlu0 %1464
        %1466 = vrot.lane.b32.xlu0 %v1393, 20
        %v1467 = vpop.permute.xlu0 %1466
        %1468 = vrot.lane.b32.xlu0 %v1395, 20
        %v1469 = vpop.permute.xlu0 %1468
        %1470 = vrot.lane.b32.xlu0 %v1398, 20
        %v1471 = vpop.permute.xlu0 %1470
        %1472 = vrot.lane.b32.xlu0 %v1400, 20
        %v1473 = vpop.permute.xlu0 %1472
        %1474 = vrot.lane.b32.xlu0 %v1403, 20
        %v1475 = vpop.permute.xlu0 %1474
        %1476 = vrot.lane.b32.xlu0 %v1405, 20
        %v1477 = vpop.permute.xlu0 %1476
        %1478 = vrot.lane.b32.xlu0 %v1408, 20
        %v1479 = vpop.permute.xlu0 %1478
        %1480 = vrot.lane.b32.xlu0 %v1410, 20
        %v1481 = vpop.permute.xlu0 %1480
        %1482 = vrot.lane.b32.xlu0 %v1413, 20
        %v1483 = vpop.permute.xlu0 %1482
        %1484 = vrot.lane.b32.xlu0 %v1415, 20
        %v1485 = vpop.permute.xlu0 %1484
        %1486 = vrot.lane.b32.xlu0 %v1418, 20
        %v1487 = vpop.permute.xlu0 %1486
        %1488 = vrot.lane.b32.xlu0 %v1420, 20
        %v1489 = vpop.permute.xlu0 %1488
        %1490 = vrot.lane.b32.xlu0 %v1423, 20
        %v1491 = vpop.permute.xlu0 %1490
        %1492 = vrot.lane.b32.xlu0 %v1425, 20
        %v1493 = vpop.permute.xlu0 %1492
        %1494 = vrot.lane.b32.xlu0 %v1428, 20
        %v1495 = vpop.permute.xlu0 %1494
        %1496 = vrot.lane.b32.xlu0 %v1430, 20
        %v1497 = vpop.permute.xlu0 %1496
        %1498 = vrot.lane.b32.xlu0 %v1433, 20
        %v1499 = vpop.permute.xlu0 %1498
        %1500 = vrot.lane.b32.xlu0 %v1435, 20
        %v1501 = vpop.permute.xlu0 %1500
        %1502 = vrot.lane.b32.xlu0 %v1438, 20
        %v1503 = vpop.permute.xlu0 %1502
        %1504 = vrot.lane.b32.xlu0 %v1440, 20
        %v1505 = vpop.permute.xlu0 %1504
        %1506 = vrot.lane.b32.xlu0 %v1443, 20
        %v1507 = vpop.permute.xlu0 %1506
        %1508 = vrot.lane.b32.xlu0 %v1445, 20
        %v1509 = vpop.permute.xlu0 %1508
        %1574 = vrot.lane.b32.xlu0 %v516, 24
        %v1575 = vpop.permute.xlu0 %1574
        %1576 = vrot.lane.b32.xlu0 %v517, 24
        %v1577 = vpop.permute.xlu0 %1576
        %1578 = vrot.lane.b32.xlu0 %v518, 24
        %v1579 = vpop.permute.xlu0 %1578
        %1580 = vrot.lane.b32.xlu0 %v519, 24
        %v1581 = vpop.permute.xlu0 %1580
        %1582 = vrot.lane.b32.xlu0 %v520, 24
        %v1583 = vpop.permute.xlu0 %1582
        %1584 = vrot.lane.b32.xlu0 %v521, 24
        %v1585 = vpop.permute.xlu0 %1584
        %1586 = vrot.lane.b32.xlu0 %v522, 24
        %v1587 = vpop.permute.xlu0 %1586
        %1588 = vrot.lane.b32.xlu0 %v523, 24
        %v1589 = vpop.permute.xlu0 %1588
        %1590 = vrot.lane.b32.xlu0 %v524, 24
        %v1591 = vpop.permute.xlu0 %1590
        %1592 = vrot.lane.b32.xlu0 %v525, 24
        %v1593 = vpop.permute.xlu0 %1592
        %1594 = vrot.lane.b32.xlu0 %v526, 24
        %v1595 = vpop.permute.xlu0 %1594
        %1596 = vrot.lane.b32.xlu0 %v527, 24
        %v1597 = vpop.permute.xlu0 %1596
        %1598 = vrot.lane.b32.xlu0 %v528, 24
        %v1599 = vpop.permute.xlu0 %1598
        %1600 = vrot.lane.b32.xlu0 %v529, 24
        %v1601 = vpop.permute.xlu0 %1600
        %1602 = vrot.lane.b32.xlu0 %v530, 24
        %v1603 = vpop.permute.xlu0 %1602
        %1604 = vrot.lane.b32.xlu0 %v531, 24
        %v1605 = vpop.permute.xlu0 %1604
        %1606 = vrot.lane.b32.xlu0 %v532, 24
        %v1607 = vpop.permute.xlu0 %1606
        %1608 = vrot.lane.b32.xlu0 %v533, 24
        %v1609 = vpop.permute.xlu0 %1608
        %1610 = vrot.lane.b32.xlu0 %v534, 24
        %v1611 = vpop.permute.xlu0 %1610
        %1612 = vrot.lane.b32.xlu0 %v535, 24
        %v1613 = vpop.permute.xlu0 %1612
        %1614 = vrot.lane.b32.xlu0 %v536, 24
        %v1615 = vpop.permute.xlu0 %1614
        %1616 = vrot.lane.b32.xlu0 %v537, 24
        %v1617 = vpop.permute.xlu0 %1616
        %1618 = vrot.lane.b32.xlu0 %v538, 24
        %v1619 = vpop.permute.xlu0 %1618
        %1620 = vrot.lane.b32.xlu0 %v539, 24
        %v1621 = vpop.permute.xlu0 %1620
        %1622 = vrot.lane.b32.xlu0 %v540, 24
        %v1623 = vpop.permute.xlu0 %1622
        %1624 = vrot.lane.b32.xlu0 %v541, 24
        %v1625 = vpop.permute.xlu0 %1624
        %1626 = vrot.lane.b32.xlu0 %v542, 24
        %v1627 = vpop.permute.xlu0 %1626
        %1628 = vrot.lane.b32.xlu0 %v543, 24
        %v1629 = vpop.permute.xlu0 %1628
        %1630 = vrot.lane.b32.xlu0 %v544, 24
        %v1631 = vpop.permute.xlu0 %1630
        %1632 = vrot.lane.b32.xlu0 %v545, 24
        %v1633 = vpop.permute.xlu0 %1632
        %1634 = vrot.lane.b32.xlu0 %v546, 24
        %v1635 = vpop.permute.xlu0 %1634
        %1636 = vrot.lane.b32.xlu0 %v547, 24
        %v1637 = vpop.permute.xlu0 %1636
        %v1686 = vrot.slane %v516, 1
        %v1687 = vrot.slane %v517, 1
        %v1688 = vsel %vm660, %v1686, %v1687
        %v1689 = vrot.slane %v564, 1
        %v1690 = vsel %vm660, %v1687, %v1689
        %v1691 = vrot.slane %v518, 1
        %v1692 = vrot.slane %v519, 1
        %v1693 = vsel %vm660, %v1691, %v1692
        %v1694 = vrot.slane %v565, 1
        %v1695 = vsel %vm660, %v1692, %v1694
        %v1696 = vrot.slane %v520, 1
        %v1697 = vrot.slane %v521, 1
        %v1698 = vsel %vm660, %v1696, %v1697
        %v1699 = vrot.slane %v566, 1
        %v1700 = vsel %vm660, %v1697, %v1699
        %v1701 = vrot.slane %v522, 1
        %v1702 = vrot.slane %v523, 1
        %v1703 = vsel %vm660, %v1701, %v1702
        %v1704 = vrot.slane %v567, 1
        %v1705 = vsel %vm660, %v1702, %v1704
        %v1706 = vrot.slane %v524, 1
        %v1707 = vrot.slane %v525, 1
        %v1708 = vsel %vm660, %v1706, %v1707
        %v1709 = vrot.slane %v568, 1
        %v1710 = vsel %vm660, %v1707, %v1709
        %v1711 = vrot.slane %v526, 1
        %v1712 = vrot.slane %v527, 1
        %v1713 = vsel %vm660, %v1711, %v1712
        %v1714 = vrot.slane %v569, 1
        %v1715 = vsel %vm660, %v1712, %v1714
        %v1716 = vrot.slane %v528, 1
        %v1717 = vrot.slane %v529, 1
        %v1718 = vsel %vm660, %v1716, %v1717
        %v1719 = vrot.slane %v570, 1
        %v1720 = vsel %vm660, %v1717, %v1719
        %v1721 = vrot.slane %v530, 1
        %v1722 = vrot.slane %v531, 1
        %v1723 = vsel %vm660, %v1721, %v1722
        %v1724 = vrot.slane %v571, 1
        %v1725 = vsel %vm660, %v1722, %v1724
        %v1726 = vrot.slane %v532, 1
        %v1727 = vrot.slane %v533, 1
        %v1728 = vsel %vm660, %v1726, %v1727
        %v1729 = vrot.slane %v572, 1
        %v1730 = vsel %vm660, %v1727, %v1729
        %v1731 = vrot.slane %v534, 1
        %v1732 = vrot.slane %v535, 1
        %v1733 = vsel %vm660, %v1731, %v1732
        %v1734 = vrot.slane %v573, 1
        %v1735 = vsel %vm660, %v1732, %v1734
        %v1736 = vrot.slane %v536, 1
        %v1737 = vrot.slane %v537, 1
        %v1738 = vsel %vm660, %v1736, %v1737
        %v1739 = vrot.slane %v574, 1
        %v1740 = vsel %vm660, %v1737, %v1739
        %v1741 = vrot.slane %v538, 1
        %v1742 = vrot.slane %v539, 1
        %v1743 = vsel %vm660, %v1741, %v1742
        %v1744 = vrot.slane %v575, 1
        %v1745 = vsel %vm660, %v1742, %v1744
        %v1746 = vrot.slane %v540, 1
        %v1747 = vrot.slane %v541, 1
        %v1748 = vsel %vm660, %v1746, %v1747
        %v1749 = vrot.slane %v576, 1
        %v1750 = vsel %vm660, %v1747, %v1749
        %v1751 = vrot.slane %v542, 1
        %v1752 = vrot.slane %v543, 1
        %v1753 = vsel %vm660, %v1751, %v1752
        %v1754 = vrot.slane %v577, 1
        %v1755 = vsel %vm660, %v1752, %v1754
        %v1756 = vrot.slane %v544, 1
        %v1757 = vrot.slane %v545, 1
        %v1758 = vsel %vm660, %v1756, %v1757
        %v1759 = vrot.slane %v578, 1
        %v1760 = vsel %vm660, %v1757, %v1759
        %v1761 = vrot.slane %v546, 1
        %v1762 = vrot.slane %v547, 1
        %v1763 = vsel %vm660, %v1761, %v1762
        %v1764 = vrot.slane %v579, 1
        %v1765 = vsel %vm660, %v1762, %v1764
        %1766 = vrot.lane.b32.xlu0 %v1688, 28
        %v1767 = vpop.permute.xlu0 %1766
        %1768 = vrot.lane.b32.xlu0 %v1690, 28
        %v1769 = vpop.permute.xlu0 %1768
        %1770 = vrot.lane.b32.xlu0 %v1693, 28
        %v1771 = vpop.permute.xlu0 %1770
        %1772 = vrot.lane.b32.xlu0 %v1695, 28
        %v1773 = vpop.permute.xlu0 %1772
        %1774 = vrot.lane.b32.xlu0 %v1698, 28
        %v1775 = vpop.permute.xlu0 %1774
        %1776 = vrot.lane.b32.xlu0 %v1700, 28
        %v1777 = vpop.permute.xlu0 %1776
        %1778 = vrot.lane.b32.xlu0 %v1703, 28
        %v1779 = vpop.permute.xlu0 %1778
        %1780 = vrot.lane.b32.xlu0 %v1705, 28
        %v1781 = vpop.permute.xlu0 %1780
        %1782 = vrot.lane.b32.xlu0 %v1708, 28
        %v1783 = vpop.permute.xlu0 %1782
        %1784 = vrot.lane.b32.xlu0 %v1710, 28
        %v1785 = vpop.permute.xlu0 %1784
        %1786 = vrot.lane.b32.xlu0 %v1713, 28
        %v1787 = vpop.permute.xlu0 %1786
        %1788 = vrot.lane.b32.xlu0 %v1715, 28
        %v1789 = vpop.permute.xlu0 %1788
        %1790 = vrot.lane.b32.xlu0 %v1718, 28
        %v1791 = vpop.permute.xlu0 %1790
        %1792 = vrot.lane.b32.xlu0 %v1720, 28
        %v1793 = vpop.permute.xlu0 %1792
        %1794 = vrot.lane.b32.xlu0 %v1723, 28
        %v1795 = vpop.permute.xlu0 %1794
        %1796 = vrot.lane.b32.xlu0 %v1725, 28
        %v1797 = vpop.permute.xlu0 %1796
        %1798 = vrot.lane.b32.xlu0 %v1728, 28
        %v1799 = vpop.permute.xlu0 %1798
        %1800 = vrot.lane.b32.xlu0 %v1730, 28
        %v1801 = vpop.permute.xlu0 %1800
        %1802 = vrot.lane.b32.xlu0 %v1733, 28
        %v1803 = vpop.permute.xlu0 %1802
        %1804 = vrot.lane.b32.xlu0 %v1735, 28
        %v1805 = vpop.permute.xlu0 %1804
        %1806 = vrot.lane.b32.xlu0 %v1738, 28
        %v1807 = vpop.permute.xlu0 %1806
        %1808 = vrot.lane.b32.xlu0 %v1740, 28
        %v1809 = vpop.permute.xlu0 %1808
        %1810 = vrot.lane.b32.xlu0 %v1743, 28
        %v1811 = vpop.permute.xlu0 %1810
        %1812 = vrot.lane.b32.xlu0 %v1745, 28
        %v1813 = vpop.permute.xlu0 %1812
        %1814 = vrot.lane.b32.xlu0 %v1748, 28
        %v1815 = vpop.permute.xlu0 %1814
        %1816 = vrot.lane.b32.xlu0 %v1750, 28
        %v1817 = vpop.permute.xlu0 %1816
        %1818 = vrot.lane.b32.xlu0 %v1753, 28
        %v1819 = vpop.permute.xlu0 %1818
        %1820 = vrot.lane.b32.xlu0 %v1755, 28
        %v1821 = vpop.permute.xlu0 %1820
        %1822 = vrot.lane.b32.xlu0 %v1758, 28
        %v1823 = vpop.permute.xlu0 %1822
        %1824 = vrot.lane.b32.xlu0 %v1760, 28
        %v1825 = vpop.permute.xlu0 %1824
        %1826 = vrot.lane.b32.xlu0 %v1763, 28
        %v1827 = vpop.permute.xlu0 %1826
        %1828 = vrot.lane.b32.xlu0 %v1765, 28
        %v1829 = vpop.permute.xlu0 %1828
        %v1878 = vrot.slane %v596, 2
        %v1879 = vrot.slane %v517, 2
        %v1880 = vsel %vm853, %v1878, %v1879
        %v1881 = vrot.slane %v564, 2
        %v1882 = vsel %vm853, %v1879, %v1881
        %v1883 = vrot.slane %v597, 2
        %v1884 = vrot.slane %v519, 2
        %v1885 = vsel %vm853, %v1883, %v1884
        %v1886 = vrot.slane %v565, 2
        %v1887 = vsel %vm853, %v1884, %v1886
        %v1888 = vrot.slane %v598, 2
        %v1889 = vrot.slane %v521, 2
        %v1890 = vsel %vm853, %v1888, %v1889
        %v1891 = vrot.slane %v566, 2
        %v1892 = vsel %vm853, %v1889, %v1891
        %v1893 = vrot.slane %v599, 2
        %v1894 = vrot.slane %v523, 2
        %v1895 = vsel %vm853, %v1893, %v1894
        %v1896 = vrot.slane %v567, 2
        %v1897 = vsel %vm853, %v1894, %v1896
        %v1898 = vrot.slane %v600, 2
        %v1899 = vrot.slane %v525, 2
        %v1900 = vsel %vm853, %v1898, %v1899
        %v1901 = vrot.slane %v568, 2
        %v1902 = vsel %vm853, %v1899, %v1901
        %v1903 = vrot.slane %v601, 2
        %v1904 = vrot.slane %v527, 2
        %v1905 = vsel %vm853, %v1903, %v1904
        %v1906 = vrot.slane %v569, 2
        %v1907 = vsel %vm853, %v1904, %v1906
        %v1908 = vrot.slane %v602, 2
        %v1909 = vrot.slane %v529, 2
        %v1910 = vsel %vm853, %v1908, %v1909
        %v1911 = vrot.slane %v570, 2
        %v1912 = vsel %vm853, %v1909, %v1911
        %v1913 = vrot.slane %v603, 2
        %v1914 = vrot.slane %v531, 2
        %v1915 = vsel %vm853, %v1913, %v1914
        %v1916 = vrot.slane %v571, 2
        %v1917 = vsel %vm853, %v1914, %v1916
        %v1918 = vrot.slane %v604, 2
        %v1919 = vrot.slane %v533, 2
        %v1920 = vsel %vm853, %v1918, %v1919
        %v1921 = vrot.slane %v572, 2
        %v1922 = vsel %vm853, %v1919, %v1921
        %v1923 = vrot.slane %v605, 2
        %v1924 = vrot.slane %v535, 2
        %v1925 = vsel %vm853, %v1923, %v1924
        %v1926 = vrot.slane %v573, 2
        %v1927 = vsel %vm853, %v1924, %v1926
        %v1928 = vrot.slane %v606, 2
        %v1929 = vrot.slane %v537, 2
        %v1930 = vsel %vm853, %v1928, %v1929
        %v1931 = vrot.slane %v574, 2
        %v1932 = vsel %vm853, %v1929, %v1931
        %v1933 = vrot.slane %v607, 2
        %v1934 = vrot.slane %v539, 2
        %v1935 = vsel %vm853, %v1933, %v1934
        %v1936 = vrot.slane %v575, 2
        %v1937 = vsel %vm853, %v1934, %v1936
        %v1938 = vrot.slane %v608, 2
        %v1939 = vrot.slane %v541, 2
        %v1940 = vsel %vm853, %v1938, %v1939
        %v1941 = vrot.slane %v576, 2
        %v1942 = vsel %vm853, %v1939, %v1941
        %v1943 = vrot.slane %v609, 2
        %v1944 = vrot.slane %v543, 2
        %v1945 = vsel %vm853, %v1943, %v1944
        %v1946 = vrot.slane %v577, 2
        %v1947 = vsel %vm853, %v1944, %v1946
        %v1948 = vrot.slane %v610, 2
        %v1949 = vrot.slane %v545, 2
        %v1950 = vsel %vm853, %v1948, %v1949
        %v1951 = vrot.slane %v578, 2
        %v1952 = vsel %vm853, %v1949, %v1951
        %v1953 = vrot.slane %v611, 2
        %v1954 = vrot.slane %v547, 2
        %v1955 = vsel %vm853, %v1953, %v1954
        %v1956 = vrot.slane %v579, 2
        %v1957 = vsel %vm853, %v1954, %v1956
        %1958 = vrot.lane.b32.xlu0 %v1880, 32
        %v1959 = vpop.permute.xlu0 %1958
        %1960 = vrot.lane.b32.xlu0 %v1882, 32
        %v1961 = vpop.permute.xlu0 %1960
        %1962 = vrot.lane.b32.xlu0 %v1885, 32
        %v1963 = vpop.permute.xlu0 %1962
        %1964 = vrot.lane.b32.xlu0 %v1887, 32
        %v1965 = vpop.permute.xlu0 %1964
        %1966 = vrot.lane.b32.xlu0 %v1890, 32
        %v1967 = vpop.permute.xlu0 %1966
        %1968 = vrot.lane.b32.xlu0 %v1892, 32
        %v1969 = vpop.permute.xlu0 %1968
        %1970 = vrot.lane.b32.xlu0 %v1895, 32
        %v1971 = vpop.permute.xlu0 %1970
        %1972 = vrot.lane.b32.xlu0 %v1897, 32
        %v1973 = vpop.permute.xlu0 %1972
        %1974 = vrot.lane.b32.xlu0 %v1900, 32
        %v1975 = vpop.permute.xlu0 %1974
        %1976 = vrot.lane.b32.xlu0 %v1902, 32
        %v1977 = vpop.permute.xlu0 %1976
        %1978 = vrot.lane.b32.xlu0 %v1905, 32
        %v1979 = vpop.permute.xlu0 %1978
        %1980 = vrot.lane.b32.xlu0 %v1907, 32
        %v1981 = vpop.permute.xlu0 %1980
        %1982 = vrot.lane.b32.xlu0 %v1910, 32
        %v1983 = vpop.permute.xlu0 %1982
        %1984 = vrot.lane.b32.xlu0 %v1912, 32
        %v1985 = vpop.permute.xlu0 %1984
        %1986 = vrot.lane.b32.xlu0 %v1915, 32
        %v1987 = vpop.permute.xlu0 %1986
        %1988 = vrot.lane.b32.xlu0 %v1917, 32
        %v1989 = vpop.permute.xlu0 %1988
        %1990 = vrot.lane.b32.xlu0 %v1920, 32
        %v1991 = vpop.permute.xlu0 %1990
        %1992 = vrot.lane.b32.xlu0 %v1922, 32
        %v1993 = vpop.permute.xlu0 %1992
        %1994 = vrot.lane.b32.xlu0 %v1925, 32
        %v1995 = vpop.permute.xlu0 %1994
        %1996 = vrot.lane.b32.xlu0 %v1927, 32
        %v1997 = vpop.permute.xlu0 %1996
        %1998 = vrot.lane.b32.xlu0 %v1930, 32
        %v1999 = vpop.permute.xlu0 %1998
        %2000 = vrot.lane.b32.xlu0 %v1932, 32
        %v2001 = vpop.permute.xlu0 %2000
        %2002 = vrot.lane.b32.xlu0 %v1935, 32
        %v2003 = vpop.permute.xlu0 %2002
        %2004 = vrot.lane.b32.xlu0 %v1937, 32
        %v2005 = vpop.permute.xlu0 %2004
        %2006 = vrot.lane.b32.xlu0 %v1940, 32
        %v2007 = vpop.permute.xlu0 %2006
        %2008 = vrot.lane.b32.xlu0 %v1942, 32
        %v2009 = vpop.permute.xlu0 %2008
        %2010 = vrot.lane.b32.xlu0 %v1945, 32
        %v2011 = vpop.permute.xlu0 %2010
        %2012 = vrot.lane.b32.xlu0 %v1947, 32
        %v2013 = vpop.permute.xlu0 %2012
        %2014 = vrot.lane.b32.xlu0 %v1950, 32
        %v2015 = vpop.permute.xlu0 %2014
        %2016 = vrot.lane.b32.xlu0 %v1952, 32
        %v2017 = vpop.permute.xlu0 %2016
        %2018 = vrot.lane.b32.xlu0 %v1955, 32
        %v2019 = vpop.permute.xlu0 %2018
        %2020 = vrot.lane.b32.xlu0 %v1957, 32
        %v2021 = vpop.permute.xlu0 %2020
        %vm2054 = vcmask 31744
        %v2055 = vsel %vm2054, %v258, %v742
        %v2056 = vsel %vm2054, %v259, %v744
        %v2057 = vsel %vm2054, %v260, %v746
        %v2058 = vsel %vm2054, %v261, %v748
        %v2059 = vsel %vm2054, %v262, %v750
        %v2060 = vsel %vm2054, %v263, %v752
        %v2061 = vsel %vm2054, %v264, %v754
        %v2062 = vsel %vm2054, %v265, %v756
        %v2063 = vsel %vm2054, %v266, %v758
        %v2064 = vsel %vm2054, %v267, %v760
        %v2065 = vsel %vm2054, %v268, %v762
        %v2066 = vsel %vm2054, %v269, %v764
        %v2067 = vsel %vm2054, %v270, %v766
        %v2068 = vsel %vm2054, %v271, %v768
        %v2069 = vsel %vm2054, %v272, %v770
        %v2070 = vsel %vm2054, %v273, %v772
        %v2071 = vsel %vm2054, %v274, %v774
        %v2072 = vsel %vm2054, %v275, %v776
        %v2073 = vsel %vm2054, %v276, %v778
        %v2074 = vsel %vm2054, %v277, %v780
        %v2075 = vsel %vm2054, %v278, %v782
        %v2076 = vsel %vm2054, %v279, %v784
        %v2077 = vsel %vm2054, %v280, %v786
        %v2078 = vsel %vm2054, %v281, %v788
        %v2079 = vsel %vm2054, %v282, %v790
        %v2080 = vsel %vm2054, %v283, %v792
        %v2081 = vsel %vm2054, %v284, %v794
        %v2082 = vsel %vm2054, %v285, %v796
        %v2083 = vsel %vm2054, %v286, %v798
        %v2084 = vsel %vm2054, %v287, %v800
        %v2085 = vsel %vm2054, %v288, %v802
        %v2086 = vsel %vm2054, %v289, %v804
        %vm2087 = vcmask 64512
        %v2088 = vsel %vm2087, %v2055, %v935
        %v2089 = vsel %vm2087, %v2056, %v937
        %v2090 = vsel %vm2087, %v2057, %v939
        %v2091 = vsel %vm2087, %v2058, %v941
        %v2092 = vsel %vm2087, %v2059, %v943
        %v2093 = vsel %vm2087, %v2060, %v945
        %v2094 = vsel %vm2087, %v2061, %v947
        %v2095 = vsel %vm2087, %v2062, %v949
        %v2096 = vsel %vm2087, %v2063, %v951
        %v2097 = vsel %vm2087, %v2064, %v953
        %v2098 = vsel %vm2087, %v2065, %v955
        %v2099 = vsel %vm2087, %v2066, %v957
        %v2100 = vsel %vm2087, %v2067, %v959
        %v2101 = vsel %vm2087, %v2068, %v961
        %v2102 = vsel %vm2087, %v2069, %v963
        %v2103 = vsel %vm2087, %v2070, %v965
        %v2104 = vsel %vm2087, %v2071, %v967
        %v2105 = vsel %vm2087, %v2072, %v969
        %v2106 = vsel %vm2087, %v2073, %v971
        %v2107 = vsel %vm2087, %v2074, %v973
        %v2108 = vsel %vm2087, %v2075, %v975
        %v2109 = vsel %vm2087, %v2076, %v977
        %v2110 = vsel %vm2087, %v2077, %v979
        %v2111 = vsel %vm2087, %v2078, %v981
        %v2112 = vsel %vm2087, %v2079, %v983
        %v2113 = vsel %vm2087, %v2080, %v985
        %v2114 = vsel %vm2087, %v2081, %v987
        %v2115 = vsel %vm2087, %v2082, %v989
        %v2116 = vsel %vm2087, %v2083, %v991
        %v2117 = vsel %vm2087, %v2084, %v993
        %v2118 = vsel %vm2087, %v2085, %v995
        %v2119 = vsel %vm2087, %v2086, %v997
        %vm2120 = vcmask 97280
        %v2121 = vsel %vm2120, %v2088, %v1063
        %v2122 = vsel %vm2120, %v2089, %v1065
        %v2123 = vsel %vm2120, %v2090, %v1067
        %v2124 = vsel %vm2120, %v2091, %v1069
        %v2125 = vsel %vm2120, %v2092, %v1071
        %v2126 = vsel %vm2120, %v2093, %v1073
        %v2127 = vsel %vm2120, %v2094, %v1075
        %v2128 = vsel %vm2120, %v2095, %v1077
        %v2129 = vsel %vm2120, %v2096, %v1079
        %v2130 = vsel %vm2120, %v2097, %v1081
        %v2131 = vsel %vm2120, %v2098, %v1083
        %v2132 = vsel %vm2120, %v2099, %v1085
        %v2133 = vsel %vm2120, %v2100, %v1087
        %v2134 = vsel %vm2120, %v2101, %v1089
        %v2135 = vsel %vm2120, %v2102, %v1091
        %v2136 = vsel %vm2120, %v2103, %v1093
        %v2137 = vsel %vm2120, %v2104, %v1095
        %v2138 = vsel %vm2120, %v2105, %v1097
        %v2139 = vsel %vm2120, %v2106, %v1099
        %v2140 = vsel %vm2120, %v2107, %v1101
        %v2141 = vsel %vm2120, %v2108, %v1103
        %v2142 = vsel %vm2120, %v2109, %v1105
        %v2143 = vsel %vm2120, %v2110, %v1107
        %v2144 = vsel %vm2120, %v2111, %v1109
        %v2145 = vsel %vm2120, %v2112, %v1111
        %v2146 = vsel %vm2120, %v2113, %v1113
        %v2147 = vsel %vm2120, %v2114, %v1115
        %v2148 = vsel %vm2120, %v2115, %v1117
        %v2149 = vsel %vm2120, %v2116, %v1119
        %v2150 = vsel %vm2120, %v2117, %v1121
        %v2151 = vsel %vm2120, %v2118, %v1123
        %v2152 = vsel %vm2120, %v2119, %v1125
        %vm2153 = vcmask 130048
        %v2154 = vsel %vm2153, %v2121, %v1255
        %v2155 = vsel %vm2153, %v2122, %v1257
        %v2156 = vsel %vm2153, %v2123, %v1259
        %v2157 = vsel %vm2153, %v2124, %v1261
        %v2158 = vsel %vm2153, %v2125, %v1263
        %v2159 = vsel %vm2153, %v2126, %v1265
        %v2160 = vsel %vm2153, %v2127, %v1267
        %v2161 = vsel %vm2153, %v2128, %v1269
        %v2162 = vsel %vm2153, %v2129, %v1271
        %v2163 = vsel %vm2153, %v2130, %v1273
        %v2164 = vsel %vm2153, %v2131, %v1275
        %v2165 = vsel %vm2153, %v2132, %v1277
        %v2166 = vsel %vm2153, %v2133, %v1279
        %v2167 = vsel %vm2153, %v2134, %v1281
        %v2168 = vsel %vm2153, %v2135, %v1283
        %v2169 = vsel %vm2153, %v2136, %v1285
        %v2170 = vsel %vm2153, %v2137, %v1287
        %v2171 = vsel %vm2153, %v2138, %v1289
        %v2172 = vsel %vm2153, %v2139, %v1291
        %v2173 = vsel %vm2153, %v2140, %v1293
        %v2174 = vsel %vm2153, %v2141, %v1295
        %v2175 = vsel %vm2153, %v2142, %v1297
        %v2176 = vsel %vm2153, %v2143, %v1299
        %v2177 = vsel %vm2153, %v2144, %v1301
        %v2178 = vsel %vm2153, %v2145, %v1303
        %v2179 = vsel %vm2153, %v2146, %v1305
        %v2180 = vsel %vm2153, %v2147, %v1307
        %v2181 = vsel %vm2153, %v2148, %v1309
        %v2182 = vsel %vm2153, %v2149, %v1311
        %v2183 = vsel %vm2153, %v2150, %v1313
        %v2184 = vsel %vm2153, %v2151, %v1315
        %v2185 = vsel %vm2153, %v2152, %v1317
        %vm2186 = vcmask 162816
        %v2187 = vsel %vm2186, %v2154, %v1447
        %v2188 = vsel %vm2186, %v2155, %v1449
        %v2189 = vsel %vm2186, %v2156, %v1451
        %v2190 = vsel %vm2186, %v2157, %v1453
        %v2191 = vsel %vm2186, %v2158, %v1455
        %v2192 = vsel %vm2186, %v2159, %v1457
        %v2193 = vsel %vm2186, %v2160, %v1459
        %v2194 = vsel %vm2186, %v2161, %v1461
        %v2195 = vsel %vm2186, %v2162, %v1463
        %v2196 = vsel %vm2186, %v2163, %v1465
        %v2197 = vsel %vm2186, %v2164, %v1467
        %v2198 = vsel %vm2186, %v2165, %v1469
        %v2199 = vsel %vm2186, %v2166, %v1471
        %v2200 = vsel %vm2186, %v2167, %v1473
        %v2201 = vsel %vm2186, %v2168, %v1475
        %v2202 = vsel %vm2186, %v2169, %v1477
        %v2203 = vsel %vm2186, %v2170, %v1479
        %v2204 = vsel %vm2186, %v2171, %v1481
        %v2205 = vsel %vm2186, %v2172, %v1483
        %v2206 = vsel %vm2186, %v2173, %v1485
        %v2207 = vsel %vm2186, %v2174, %v1487
        %v2208 = vsel %vm2186, %v2175, %v1489
        %v2209 = vsel %vm2186, %v2176, %v1491
        %v2210 = vsel %vm2186, %v2177, %v1493
        %v2211 = vsel %vm2186, %v2178, %v1495
        %v2212 = vsel %vm2186, %v2179, %v1497
        %v2213 = vsel %vm2186, %v2180, %v1499
        %v2214 = vsel %vm2186, %v2181, %v1501
        %v2215 = vsel %vm2186, %v2182, %v1503
        %v2216 = vsel %vm2186, %v2183, %v1505
        %v2217 = vsel %vm2186, %v2184, %v1507
        %v2218 = vsel %vm2186, %v2185, %v1509
        %vm2219 = vcmask 195584
        %v2220 = vsel %vm2219, %v2187, %v1575
        %v2221 = vsel %vm2219, %v2188, %v1577
        %v2222 = vsel %vm2219, %v2189, %v1579
        %v2223 = vsel %vm2219, %v2190, %v1581
        %v2224 = vsel %vm2219, %v2191, %v1583
        %v2225 = vsel %vm2219, %v2192, %v1585
        %v2226 = vsel %vm2219, %v2193, %v1587
        %v2227 = vsel %vm2219, %v2194, %v1589
        %v2228 = vsel %vm2219, %v2195, %v1591
        %v2229 = vsel %vm2219, %v2196, %v1593
        %v2230 = vsel %vm2219, %v2197, %v1595
        %v2231 = vsel %vm2219, %v2198, %v1597
        %v2232 = vsel %vm2219, %v2199, %v1599
        %v2233 = vsel %vm2219, %v2200, %v1601
        %v2234 = vsel %vm2219, %v2201, %v1603
        %v2235 = vsel %vm2219, %v2202, %v1605
        %v2236 = vsel %vm2219, %v2203, %v1607
        %v2237 = vsel %vm2219, %v2204, %v1609
        %v2238 = vsel %vm2219, %v2205, %v1611
        %v2239 = vsel %vm2219, %v2206, %v1613
        %v2240 = vsel %vm2219, %v2207, %v1615
        %v2241 = vsel %vm2219, %v2208, %v1617
        %v2242 = vsel %vm2219, %v2209, %v1619
        %v2243 = vsel %vm2219, %v2210, %v1621
        %v2244 = vsel %vm2219, %v2211, %v1623
        %v2245 = vsel %vm2219, %v2212, %v1625
        %v2246 = vsel %vm2219, %v2213, %v1627
        %v2247 = vsel %vm2219, %v2214, %v1629
        %v2248 = vsel %vm2219, %v2215, %v1631
        %v2249 = vsel %vm2219, %v2216, %v1633
        %v2250 = vsel %vm2219, %v2217, %v1635
        %v2251 = vsel %vm2219, %v2218, %v1637
        %vm2252 = vcmask 228352
        %v2253 = vsel %vm2252, %v2220, %v1767
        %v2254 = vsel %vm2252, %v2221, %v1769
        %v2255 = vsel %vm2252, %v2222, %v1771
        %v2256 = vsel %vm2252, %v2223, %v1773
        %v2257 = vsel %vm2252, %v2224, %v1775
        %v2258 = vsel %vm2252, %v2225, %v1777
        %v2259 = vsel %vm2252, %v2226, %v1779
        %v2260 = vsel %vm2252, %v2227, %v1781
        %v2261 = vsel %vm2252, %v2228, %v1783
        %v2262 = vsel %vm2252, %v2229, %v1785
        %v2263 = vsel %vm2252, %v2230, %v1787
        %v2264 = vsel %vm2252, %v2231, %v1789
        %v2265 = vsel %vm2252, %v2232, %v1791
        %v2266 = vsel %vm2252, %v2233, %v1793
        %v2267 = vsel %vm2252, %v2234, %v1795
        %v2268 = vsel %vm2252, %v2235, %v1797
        %v2269 = vsel %vm2252, %v2236, %v1799
        %v2270 = vsel %vm2252, %v2237, %v1801
        %v2271 = vsel %vm2252, %v2238, %v1803
        %v2272 = vsel %vm2252, %v2239, %v1805
        %v2273 = vsel %vm2252, %v2240, %v1807
        %v2274 = vsel %vm2252, %v2241, %v1809
        %v2275 = vsel %vm2252, %v2242, %v1811
        %v2276 = vsel %vm2252, %v2243, %v1813
        %v2277 = vsel %vm2252, %v2244, %v1815
        %v2278 = vsel %vm2252, %v2245, %v1817
        %v2279 = vsel %vm2252, %v2246, %v1819
        %v2280 = vsel %vm2252, %v2247, %v1821
        %v2281 = vsel %vm2252, %v2248, %v1823
        %v2282 = vsel %vm2252, %v2249, %v1825
        %v2283 = vsel %vm2252, %v2250, %v1827
        %v2284 = vsel %vm2252, %v2251, %v1829
        %vm2285 = vcmask 261120
        %v2286 = vsel %vm2285, %v2253, %v1959
        %v2287 = vsel %vm2285, %v2254, %v1961
        %v2288 = vsel %vm2285, %v2255, %v1963
        %v2289 = vsel %vm2285, %v2256, %v1965
        %v2290 = vsel %vm2285, %v2257, %v1967
        %v2291 = vsel %vm2285, %v2258, %v1969
        %v2292 = vsel %vm2285, %v2259, %v1971
        %v2293 = vsel %vm2285, %v2260, %v1973
        %v2294 = vsel %vm2285, %v2261, %v1975
        %v2295 = vsel %vm2285, %v2262, %v1977
        %v2296 = vsel %vm2285, %v2263, %v1979
        %v2297 = vsel %vm2285, %v2264, %v1981
        %v2298 = vsel %vm2285, %v2265, %v1983
        %v2299 = vsel %vm2285, %v2266, %v1985
        %v2300 = vsel %vm2285, %v2267, %v1987
        %v2301 = vsel %vm2285, %v2268, %v1989
        %v2302 = vsel %vm2285, %v2269, %v1991
        %v2303 = vsel %vm2285, %v2270, %v1993
        %v2304 = vsel %vm2285, %v2271, %v1995
        %v2305 = vsel %vm2285, %v2272, %v1997
        %v2306 = vsel %vm2285, %v2273, %v1999
        %v2307 = vsel %vm2285, %v2274, %v2001
        %v2308 = vsel %vm2285, %v2275, %v2003
        %v2309 = vsel %vm2285, %v2276, %v2005
        %v2310 = vsel %vm2285, %v2277, %v2007
        %v2311 = vsel %vm2285, %v2278, %v2009
        %v2312 = vsel %vm2285, %v2279, %v2011
        %v2313 = vsel %vm2285, %v2280, %v2013
        %v2314 = vsel %vm2285, %v2281, %v2015
        %v2315 = vsel %vm2285, %v2282, %v2017
        %v2316 = vsel %vm2285, %v2283, %v2019
        %v2317 = vsel %vm2285, %v2284, %v2021
        %v2318 = vpack.c.bf16 %v2286, %v2286
        %v2319 = vpack.c.bf16 %v2287, %v2287
        %v2320 = vpack.c.bf16 %v2288, %v2288
        %v2321 = vpack.c.bf16 %v2289, %v2289
        %v2322 = vpack.c.bf16 %v2290, %v2290
        %v2323 = vpack.c.bf16 %v2291, %v2291
        %v2324 = vpack.c.bf16 %v2292, %v2292
        %v2325 = vpack.c.bf16 %v2293, %v2293
        %v2326 = vpack.c.bf16 %v2294, %v2294
        %v2327 = vpack.c.bf16 %v2295, %v2295
        %v2328 = vpack.c.bf16 %v2296, %v2296
        %v2329 = vpack.c.bf16 %v2297, %v2297
        %v2330 = vpack.c.bf16 %v2298, %v2298
        %v2331 = vpack.c.bf16 %v2299, %v2299
        %v2332 = vpack.c.bf16 %v2300, %v2300
        %v2333 = vpack.c.bf16 %v2301, %v2301
        %v2334 = vpack.c.bf16 %v2302, %v2302
        %v2335 = vpack.c.bf16 %v2303, %v2303
        %v2336 = vpack.c.bf16 %v2304, %v2304
        %v2337 = vpack.c.bf16 %v2305, %v2305
        %v2338 = vpack.c.bf16 %v2306, %v2306
        %v2339 = vpack.c.bf16 %v2307, %v2307
        %v2340 = vpack.c.bf16 %v2308, %v2308
        %v2341 = vpack.c.bf16 %v2309, %v2309
        %v2342 = vpack.c.bf16 %v2310, %v2310
        %v2343 = vpack.c.bf16 %v2311, %v2311
        %v2344 = vpack.c.bf16 %v2312, %v2312
        %v2345 = vpack.c.bf16 %v2313, %v2313
        %v2346 = vpack.c.bf16 %v2314, %v2314
        %v2347 = vpack.c.bf16 %v2315, %v2315
        %v2348 = vpack.c.bf16 %v2316, %v2316
        %v2349 = vpack.c.bf16 %v2317, %v2317
        %v2350 = vld [vmem:[%s1] sm:$0xf]
        %v2351 = vld [vmem:[%s1 + $0x4] sm:$0xf]
        %v2352 = vld [vmem:[%s1 + $0x8] sm:$0xf]
        %v2353 = vld [vmem:[%s1 + $0xc] sm:$0xf]
        %v2354 = vld [vmem:[%s1 + $0x10] sm:$0x3]
        %v2387 = vunpack.c.l.b16 %v2318
        %v2388 = vunpack.c.l.b16 %v2319
        %v2389 = vunpack.c.l.b16 %v2320
        %v2390 = vunpack.c.l.b16 %v2321
        %v2391 = vunpack.c.l.b16 %v2322
        %v2392 = vunpack.c.l.b16 %v2323
        %v2393 = vunpack.c.l.b16 %v2324
        %v2394 = vunpack.c.l.b16 %v2325
        %v2395 = vunpack.c.l.b16 %v2326
        %v2396 = vunpack.c.l.b16 %v2327
        %v2397 = vunpack.c.l.b16 %v2328
        %v2398 = vunpack.c.l.b16 %v2329
        %v2399 = vunpack.c.l.b16 %v2330
        %v2400 = vunpack.c.l.b16 %v2331
        %v2401 = vunpack.c.l.b16 %v2332
        %v2402 = vunpack.c.l.b16 %v2333
        %v2403 = vunpack.c.l.b16 %v2334
        %v2404 = vunpack.c.l.b16 %v2335
        %v2405 = vunpack.c.l.b16 %v2336
        %v2406 = vunpack.c.l.b16 %v2337
        %v2407 = vunpack.c.l.b16 %v2338
        %v2408 = vunpack.c.l.b16 %v2339
        %v2409 = vunpack.c.l.b16 %v2340
        %v2410 = vunpack.c.l.b16 %v2341
        %v2411 = vunpack.c.l.b16 %v2342
        %v2412 = vunpack.c.l.b16 %v2343
        %v2413 = vunpack.c.l.b16 %v2344
        %v2414 = vunpack.c.l.b16 %v2345
        %v2415 = vunpack.c.l.b16 %v2346
        %v2416 = vunpack.c.l.b16 %v2347
        %v2417 = vunpack.c.l.b16 %v2348
        %v2418 = vunpack.c.l.b16 %v2349
        %v2419 = vpack.c.b16 %v2388, %v2387
        %v2420 = vpack.c.b16 %v2390, %v2389
        %v2421 = vpack.c.b16 %v2392, %v2391
        %v2422 = vpack.c.b16 %v2394, %v2393
        %v2423 = vpack.c.b16 %v2396, %v2395
        %v2424 = vpack.c.b16 %v2398, %v2397
        %v2425 = vpack.c.b16 %v2400, %v2399
        %v2426 = vpack.c.b16 %v2402, %v2401
        %v2427 = vpack.c.b16 %v2404, %v2403
        %v2428 = vpack.c.b16 %v2406, %v2405
        %v2429 = vpack.c.b16 %v2408, %v2407
        %v2430 = vpack.c.b16 %v2410, %v2409
        %v2431 = vpack.c.b16 %v2412, %v2411
        %v2432 = vpack.c.b16 %v2414, %v2413
        %v2433 = vpack.c.b16 %v2416, %v2415
        %v2434 = vpack.c.b16 %v2418, %v2417
        %v2440 = vunpack.c.l.b16 %v2350
        %v2441 = vunpack.c.l.b16 %v2351
        %v2442 = vunpack.c.l.b16 %v2352
        %v2443 = vunpack.c.l.b16 %v2353
        %v2444 = vunpack.c.l.b16 %v2354
        %v2445 = vpack.c.b16 %v2441, %v2440
        %v2446 = vpack.c.b16 %v2443, %v2442
        %v2447 = vpack.c.b16 %v2444, %v2444
        %vm2450 = vcmask 293888
        %v2452 = vsel %vm2450, %v2419, 0
        %v2455 = vsel %vm2450, %v2420, 0
        %v2458 = vsel %vm2450, %v2421, 0
        %v2461 = vsel %vm2450, %v2422, 0
        %v2464 = vsel %vm2450, %v2423, 0
        %v2467 = vsel %vm2450, %v2424, 0
        %v2470 = vsel %vm2450, %v2425, 0
        %v2473 = vsel %vm2450, %v2426, 0
        %v2476 = vsel %vm2450, %v2427, 0
        %v2479 = vsel %vm2450, %v2428, 0
        %v2482 = vsel %vm2450, %v2429, 0
        %v2485 = vsel %vm2450, %v2430, 0
        %v2488 = vsel %vm2450, %v2431, 0
        %v2491 = vsel %vm2450, %v2432, 0
        %v2494 = vsel %vm2450, %v2433, 0
        %v2497 = vsel %vm2450, %v2434, 0
        %vm2499 = vcmask 1041408
        %v2501 = vsel %vm2499, %v2447, 0
        %2503 = vmatpush.bf16.msra.mxu0 0
        %2504 = vmatpush.bf16.msra.mxu0 0
        %2505 = vmatpush.bf16.msra.mxu0 0
        %2506 = vmatpush.bf16.msra.mxu0 0
        %2507 = vmatpush.bf16.msra.mxu0 0
        %2508 = vmatpush.bf16.msra.mxu0 %v2501
        %2509 = vmatpush.bf16.msra.mxu0 %v2446
        %2510 = vmatpush.bf16.msra.mxu0 %v2445
        %2511 = vmatmul.bf16.gmra.mxu0 %v2452
        %v2512 = vpop.f32.mrf.mxu0
        %v2513 = vadd.f32 0.0, %v2512
        %v2514 = vpop.f32.mrf.mxu0
        %v2515 = vadd.f32 0.0, %v2514
        %2516 = vmatmul.bf16.gmra.mxu0 %v2455
        %v2517 = vpop.f32.mrf.mxu0
        %v2518 = vadd.f32 0.0, %v2517
        %v2519 = vpop.f32.mrf.mxu0
        %v2520 = vadd.f32 0.0, %v2519
        %2521 = vmatmul.bf16.gmra.mxu0 %v2458
        %v2522 = vpop.f32.mrf.mxu0
        %v2523 = vadd.f32 0.0, %v2522
        %v2524 = vpop.f32.mrf.mxu0
        %v2525 = vadd.f32 0.0, %v2524
        %2526 = vmatmul.bf16.gmra.mxu0 %v2461
        %v2527 = vpop.f32.mrf.mxu0
        %v2528 = vadd.f32 0.0, %v2527
        %v2529 = vpop.f32.mrf.mxu0
        %v2530 = vadd.f32 0.0, %v2529
        %2531 = vmatmul.bf16.gmra.mxu0 %v2464
        %v2532 = vpop.f32.mrf.mxu0
        %v2533 = vadd.f32 0.0, %v2532
        %v2534 = vpop.f32.mrf.mxu0
        %v2535 = vadd.f32 0.0, %v2534
        %2536 = vmatmul.bf16.gmra.mxu0 %v2467
        %v2537 = vpop.f32.mrf.mxu0
        %v2538 = vadd.f32 0.0, %v2537
        %v2539 = vpop.f32.mrf.mxu0
        %v2540 = vadd.f32 0.0, %v2539
        %2541 = vmatmul.bf16.gmra.mxu0 %v2470
        %v2542 = vpop.f32.mrf.mxu0
        %v2543 = vadd.f32 0.0, %v2542
        %v2544 = vpop.f32.mrf.mxu0
        %v2545 = vadd.f32 0.0, %v2544
        %2546 = vmatmul.bf16.gmra.mxu0 %v2473
        %v2547 = vpop.f32.mrf.mxu0
        %v2548 = vadd.f32 0.0, %v2547
        %v2549 = vpop.f32.mrf.mxu0
        %v2550 = vadd.f32 0.0, %v2549
        %2551 = vmatmul.bf16.gmra.mxu0 %v2476
        %v2552 = vpop.f32.mrf.mxu0
        %v2553 = vadd.f32 0.0, %v2552
        %v2554 = vpop.f32.mrf.mxu0
        %v2555 = vadd.f32 0.0, %v2554
        %2556 = vmatmul.bf16.gmra.mxu0 %v2479
        %v2557 = vpop.f32.mrf.mxu0
        %v2558 = vadd.f32 0.0, %v2557
        %v2559 = vpop.f32.mrf.mxu0
        %v2560 = vadd.f32 0.0, %v2559
        %2561 = vmatmul.bf16.gmra.mxu0 %v2482
        %v2562 = vpop.f32.mrf.mxu0
        %v2563 = vadd.f32 0.0, %v2562
        %v2564 = vpop.f32.mrf.mxu0
        %v2565 = vadd.f32 0.0, %v2564
        %2566 = vmatmul.bf16.gmra.mxu0 %v2485
        %v2567 = vpop.f32.mrf.mxu0
        %v2568 = vadd.f32 0.0, %v2567
        %v2569 = vpop.f32.mrf.mxu0
        %v2570 = vadd.f32 0.0, %v2569
        %2571 = vmatmul.bf16.gmra.mxu0 %v2488
        %v2572 = vpop.f32.mrf.mxu0
        %v2573 = vadd.f32 0.0, %v2572
        %v2574 = vpop.f32.mrf.mxu0
        %v2575 = vadd.f32 0.0, %v2574
        %2576 = vmatmul.bf16.gmra.mxu0 %v2491
        %v2577 = vpop.f32.mrf.mxu0
        %v2578 = vadd.f32 0.0, %v2577
        %v2579 = vpop.f32.mrf.mxu0
        %v2580 = vadd.f32 0.0, %v2579
        %2581 = vmatmul.bf16.gmra.mxu0 %v2494
        %v2582 = vpop.f32.mrf.mxu0
        %v2583 = vadd.f32 0.0, %v2582
        %v2584 = vpop.f32.mrf.mxu0
        %v2585 = vadd.f32 0.0, %v2584
        %2586 = vmatmul.bf16.gmra.mxu0 %v2497
        %v2587 = vpop.f32.mrf.mxu0
        %v2588 = vadd.f32 0.0, %v2587
        %v2589 = vpop.f32.mrf.mxu0
        %v2590 = vadd.f32 0.0, %v2589
        %2591 = vdwg.mxu0
        %v2592 = vld [vmem:[%s2] sm:$0x1]
        %v2594 = vperm.slane %v2592, 0
        %v2596 = vmul.f32 %v2513, %v2594
        %v2597 = vmul.f32 %v2515, %v2594
        %v2598 = vmul.f32 %v2518, %v2594
        %v2599 = vmul.f32 %v2520, %v2594
        %v2600 = vmul.f32 %v2523, %v2594
        %v2601 = vmul.f32 %v2525, %v2594
        %v2602 = vmul.f32 %v2528, %v2594
        %v2603 = vmul.f32 %v2530, %v2594
        %v2604 = vmul.f32 %v2533, %v2594
        %v2605 = vmul.f32 %v2535, %v2594
        %v2606 = vmul.f32 %v2538, %v2594
        %v2607 = vmul.f32 %v2540, %v2594
        %v2608 = vmul.f32 %v2543, %v2594
        %v2609 = vmul.f32 %v2545, %v2594
        %v2610 = vmul.f32 %v2548, %v2594
        %v2611 = vmul.f32 %v2550, %v2594
        %v2612 = vmul.f32 %v2553, %v2594
        %v2613 = vmul.f32 %v2555, %v2594
        %v2614 = vmul.f32 %v2558, %v2594
        %v2615 = vmul.f32 %v2560, %v2594
        %v2616 = vmul.f32 %v2563, %v2594
        %v2617 = vmul.f32 %v2565, %v2594
        %v2618 = vmul.f32 %v2568, %v2594
        %v2619 = vmul.f32 %v2570, %v2594
        %v2620 = vmul.f32 %v2573, %v2594
        %v2621 = vmul.f32 %v2575, %v2594
        %v2622 = vmul.f32 %v2578, %v2594
        %v2623 = vmul.f32 %v2580, %v2594
        %v2624 = vmul.f32 %v2583, %v2594
        %v2625 = vmul.f32 %v2585, %v2594
        %v2626 = vmul.f32 %v2588, %v2594
        %v2627 = vmul.f32 %v2590, %v2594
        %v2628 = vld [vmem:[%s3] sm:$0x1]
        %v2630 = vperm.slane %v2628, 0
        %v2632 = vadd.f32 %v2596, %v2630
        %v2633 = vadd.f32 %v2597, %v2630
        %v2634 = vadd.f32 %v2598, %v2630
        %v2635 = vadd.f32 %v2599, %v2630
        %v2636 = vadd.f32 %v2600, %v2630
        %v2637 = vadd.f32 %v2601, %v2630
        %v2638 = vadd.f32 %v2602, %v2630
        %v2639 = vadd.f32 %v2603, %v2630
        %v2640 = vadd.f32 %v2604, %v2630
        %v2641 = vadd.f32 %v2605, %v2630
        %v2642 = vadd.f32 %v2606, %v2630
        %v2643 = vadd.f32 %v2607, %v2630
        %v2644 = vadd.f32 %v2608, %v2630
        %v2645 = vadd.f32 %v2609, %v2630
        %v2646 = vadd.f32 %v2610, %v2630
        %v2647 = vadd.f32 %v2611, %v2630
        %v2648 = vadd.f32 %v2612, %v2630
        %v2649 = vadd.f32 %v2613, %v2630
        %v2650 = vadd.f32 %v2614, %v2630
        %v2651 = vadd.f32 %v2615, %v2630
        %v2652 = vadd.f32 %v2616, %v2630
        %v2653 = vadd.f32 %v2617, %v2630
        %v2654 = vadd.f32 %v2618, %v2630
        %v2655 = vadd.f32 %v2619, %v2630
        %v2656 = vadd.f32 %v2620, %v2630
        %v2657 = vadd.f32 %v2621, %v2630
        %v2658 = vadd.f32 %v2622, %v2630
        %v2659 = vadd.f32 %v2623, %v2630
        %v2660 = vadd.f32 %v2624, %v2630
        %v2661 = vadd.f32 %v2625, %v2630
        %v2662 = vadd.f32 %v2626, %v2630
        %v2663 = vadd.f32 %v2627, %v2630
        %v2664 = vmax.f32 %v2632, 0.0
        %v2665 = vmax.f32 %v2633, 0.0
        %v2666 = vmax.f32 %v2634, 0.0
        %v2667 = vmax.f32 %v2635, 0.0
        %v2668 = vmax.f32 %v2636, 0.0
        %v2669 = vmax.f32 %v2637, 0.0
        %v2670 = vmax.f32 %v2638, 0.0
        %v2671 = vmax.f32 %v2639, 0.0
        %v2672 = vmax.f32 %v2640, 0.0
        %v2673 = vmax.f32 %v2641, 0.0
        %v2674 = vmax.f32 %v2642, 0.0
        %v2675 = vmax.f32 %v2643, 0.0
        %v2676 = vmax.f32 %v2644, 0.0
        %v2677 = vmax.f32 %v2645, 0.0
        %v2678 = vmax.f32 %v2646, 0.0
        %v2679 = vmax.f32 %v2647, 0.0
        %v2680 = vmax.f32 %v2648, 0.0
        %v2681 = vmax.f32 %v2649, 0.0
        %v2682 = vmax.f32 %v2650, 0.0
        %v2683 = vmax.f32 %v2651, 0.0
        %v2684 = vmax.f32 %v2652, 0.0
        %v2685 = vmax.f32 %v2653, 0.0
        %v2686 = vmax.f32 %v2654, 0.0
        %v2687 = vmax.f32 %v2655, 0.0
        %v2688 = vmax.f32 %v2656, 0.0
        %v2689 = vmax.f32 %v2657, 0.0
        %v2690 = vmax.f32 %v2658, 0.0
        %v2691 = vmax.f32 %v2659, 0.0
        %v2692 = vmax.f32 %v2660, 0.0
        %v2693 = vmax.f32 %v2661, 0.0
        %v2694 = vmax.f32 %v2662, 0.0
        %v2695 = vmax.f32 %v2663, 0.0
        %v2696 = vpack.c.bf16 %v2664, %v2664
        %v2697 = vpack.c.bf16 %v2665, %v2665
        %v2698 = vpack.c.bf16 %v2666, %v2666
        %v2699 = vpack.c.bf16 %v2667, %v2667
        %v2700 = vpack.c.bf16 %v2668, %v2668
        %v2701 = vpack.c.bf16 %v2669, %v2669
        %v2702 = vpack.c.bf16 %v2670, %v2670
        %v2703 = vpack.c.bf16 %v2671, %v2671
        %v2704 = vpack.c.bf16 %v2672, %v2672
        %v2705 = vpack.c.bf16 %v2673, %v2673
        %v2706 = vpack.c.bf16 %v2674, %v2674
        %v2707 = vpack.c.bf16 %v2675, %v2675
        %v2708 = vpack.c.bf16 %v2676, %v2676
        %v2709 = vpack.c.bf16 %v2677, %v2677
        %v2710 = vpack.c.bf16 %v2678, %v2678
        %v2711 = vpack.c.bf16 %v2679, %v2679
        %v2712 = vpack.c.bf16 %v2680, %v2680
        %v2713 = vpack.c.bf16 %v2681, %v2681
        %v2714 = vpack.c.bf16 %v2682, %v2682
        %v2715 = vpack.c.bf16 %v2683, %v2683
        %v2716 = vpack.c.bf16 %v2684, %v2684
        %v2717 = vpack.c.bf16 %v2685, %v2685
        %v2718 = vpack.c.bf16 %v2686, %v2686
        %v2719 = vpack.c.bf16 %v2687, %v2687
        %v2720 = vpack.c.bf16 %v2688, %v2688
        %v2721 = vpack.c.bf16 %v2689, %v2689
        %v2722 = vpack.c.bf16 %v2690, %v2690
        %v2723 = vpack.c.bf16 %v2691, %v2691
        %v2724 = vpack.c.bf16 %v2692, %v2692
        %v2725 = vpack.c.bf16 %v2693, %v2693
        %v2726 = vpack.c.bf16 %v2694, %v2694
        %v2727 = vpack.c.bf16 %v2695, %v2695
        %2728 = vst [vmem:[%s214] sm:$0xf] %v2696
        %2729 = vst [vmem:[%s214 + $0x4] sm:$0xf] %v2697
        %2730 = vst [vmem:[%s214 + $0x8] sm:$0xf] %v2698
        %2731 = vst [vmem:[%s214 + $0xc] sm:$0xf] %v2699
        %2732 = vst [vmem:[%s214 + $0x10] sm:$0xf] %v2700
        %2733 = vst [vmem:[%s214 + $0x14] sm:$0xf] %v2701
        %2734 = vst [vmem:[%s214 + $0x18] sm:$0xf] %v2702
        %2735 = vst [vmem:[%s214 + $0x1c] sm:$0xf] %v2703
        %2736 = vst [vmem:[%s214 + $0x20] sm:$0xf] %v2704
        %2737 = vst [vmem:[%s214 + $0x24] sm:$0xf] %v2705
        %2738 = vst [vmem:[%s214 + $0x28] sm:$0xf] %v2706
        %2739 = vst [vmem:[%s214 + $0x2c] sm:$0xf] %v2707
        %2740 = vst [vmem:[%s214 + $0x30] sm:$0xf] %v2708
        %2741 = vst [vmem:[%s214 + $0x34] sm:$0xf] %v2709
        %2742 = vst [vmem:[%s214 + $0x38] sm:$0xf] %v2710
        %2743 = vst [vmem:[%s214 + $0x3c] sm:$0xf] %v2711
        %2744 = vst [vmem:[%s214 + $0x40] sm:$0xf] %v2712
        %2745 = vst [vmem:[%s214 + $0x44] sm:$0xf] %v2713
        %2746 = vst [vmem:[%s214 + $0x48] sm:$0xf] %v2714
        %2747 = vst [vmem:[%s214 + $0x4c] sm:$0xf] %v2715
        %2748 = vst [vmem:[%s214 + $0x50] sm:$0xf] %v2716
        %2749 = vst [vmem:[%s214 + $0x54] sm:$0xf] %v2717
        %2750 = vst [vmem:[%s214 + $0x58] sm:$0xf] %v2718
        %2751 = vst [vmem:[%s214 + $0x5c] sm:$0xf] %v2719
        %2752 = vst [vmem:[%s214 + $0x60] sm:$0xf] %v2720
        %2753 = vst [vmem:[%s214 + $0x64] sm:$0xf] %v2721
        %2754 = vst [vmem:[%s214 + $0x68] sm:$0xf] %v2722
        %2755 = vst [vmem:[%s214 + $0x6c] sm:$0xf] %v2723
        %2756 = vst [vmem:[%s214 + $0x70] sm:$0xf] %v2724
        %2757 = vst [vmem:[%s214 + $0x74] sm:$0xf] %v2725
        %2758 = vst [vmem:[%s214 + $0x78] sm:$0xf] %v2726
        %2759 = vst [vmem:[%s214 + $0x7c] sm:$0xf] %v2727
        %s2760 = sand.u32 %s131, 1
        %s2761 = scalar_lea.sflag [#allocation3], %s2760
        %s2762 = sand.u32 %s131, 1
        %s2763 = smul.addr %s2762, 128
        %s2764 = scalar_lea.vmem [#allocation2], %s2763
        // Predicated region
        $region37: #{tpu_custom_call.1} parent=35 // pred_check
          %p2765 = pneg %p141
        $region38: #{tpu_custom_call.1} parent=35 // pred_check_branch
          %2767 = sbr.rel (%p2765) target = $region40
        $region39: #{tpu_custom_call.1} parent=35 // pred_region
          %s2768 = smul.u32 16, %s23
          %2770 = vsyncadd %s2761, 0
          %s2771 = smul.addr %s2768, 2
          %s2772 = smul.addr %s22, 32
          %s2773 = sadd.s32 %s2771, %s2772
          %s2774 = smul.addr %s2773, 4
          %s2775 = scalar_lea.hbm %s4, %s2774
          %s2776 = sshll.u32 %s2764, 4
          %s2777 = int_to_ptr.vmem [resolvable:$true] %s2776
          %s2778 = sshll.u32 %s2775, 4
          %s2779 = int_to_ptr.hbm [resolvable:$true] %s2778
          %2784 = dma.vmem_to_hbm [thread:$0]  %s2777, 2048, %s2779, %s2761, 64, 64, 4
        $region40: #{tpu_custom_call.1} parent=35 // pred_fallthru
          _
      $region36: #{tpu_custom_call.1} parent=5 // pred_fallthru
        _
      %p2785 = scmp.le.s32.totalorder 2, %s13
      // Predicated region
      $region41: #{tpu_custom_call.1} parent=5 // pred_check
        %p2786 = pneg %p2785
      $region42: #{tpu_custom_call.1} parent=5 // pred_check_branch
        %2788 = sbr.rel (%p2786) target = $region44
      $region43: #{tpu_custom_call.1} parent=5 // pred_region
        %s2789 = ssub.s32 %s13, 2
        // Predicated region
        $region45: #{tpu_custom_call.1} parent=43 // pred_check
          %p2790 = pneg %p147
        $region46: #{tpu_custom_call.1} parent=43 // pred_check_branch
          %2792 = sbr.rel (%p2790) target = $region48
        $region47: #{tpu_custom_call.1} parent=43 // pred_region
          %s2793 = sand.u32 %s132, 1
          %s2794 = scalar_lea.sflag [#allocation3], %s2793
          %s2795 = sand.u32 %s132, 1
          %s2796 = smul.addr %s2795, 128
          %s2797 = scalar_lea.vmem [#allocation2], %s2796
          %2799 = dma.done %s2794, 2048
        $region48: #{tpu_custom_call.1} parent=43 // pred_fallthru
          _
      $region44: #{tpu_custom_call.1} parent=5 // pred_fallthru
        _
    $region6: #{tpu_custom_call.1} parent=1 // loop_footer
      %s17 = sadd.s32 1, %s13
    $region7: #{tpu_custom_call.1} parent=1 // loop_footer_branch
      %12 = sbr.rel target = $region3
    $region8: #{tpu_custom_call.1} parent=1 // loop_exit
      _
    %2800 = vsyncpa [#allocation3], 1
    %s2801 = scalar_lea.sflag [#allocation3], 1
    %2802 = vsyncpa %s2801, 1

</llo_original>
